<compile_context>
chip_gen: v6e
topology: v6e:2x2x1
jax: 0.10.0
libtpu: 0.0.40
codegen_flags: <defaults>
</compile_context>

<pallas_src>
import functools

import jax
import jax.numpy as jnp
from jax import lax
from jax.experimental import pallas as pl
from jax.experimental.pallas import tpu as pltpu

# ---------------- static model config ----------------
MAX_NUMS = 16            # config['max_nums']
NN = 2 * MAX_NUMS        # fused pair block: graph1 rows [0,16), graph2 rows [16,32)
D_IN = 8                 # node feature dim
HIDDEN = 32              # config['hidden_dim']
N_REL = 3                # number of edge types (relations)
GIN_EPS = 0.0            # GIN epsilon

PAIRS = 8                # graph pairs fused per 256-row tile
TILE_ROWS = PAIRS * NN   # 256
POOL_ROWS = 2 * PAIRS    # 16 (rows 0..7 = graph1 means, rows 8..15 = graph2 means)

# packed bf16 weight-slab row offsets (HIDDEN-column slab)
_W0_OFF = 0
_W1_OFF = _W0_OFF + D_IN          # 8
_WF0A_OFF = _W1_OFF + HIDDEN      # 40
_WF0B_OFF = _WF0A_OFF + HIDDEN    # 72
_WF1_OFF = _WF0B_OFF + HIDDEN     # 104 (wf1^T row; rows 105..111 are zero pad)
_W_ROWS = 112
_B_ROWS = 8                       # f32 bias slab rows: b0, b1, bf0, [bf1,0..], pad


def hgmn_kernel(x_ref, a_ref, mask_ref, invn_ref, pool_ref, w_ref, b_ref,
                out_ref, a_sc, p1_sc, p2_sc):
    """HGMN forward (node_match=False) for T tiles (T*PAIRS graph pairs) per step."""
    T = x_ref.shape[0]
    TP = p1_sc.shape[0]                       # T * PAIRS

    # ---- unpack packed weight / bias slabs (loop invariant) -----------------
    w = w_ref[...]                            # (112, 32) bf16
    w0 = w[_W0_OFF:_W0_OFF + D_IN, :]
    w1 = w[_W1_OFF:_W1_OFF + HIDDEN, :]
    wf0a = w[_WF0A_OFF:_WF0A_OFF + HIDDEN, :]
    wf0b = w[_WF0B_OFF:_WF0B_OFF + HIDDEN, :]
    wf1r8 = w[_WF1_OFF:_WF1_OFF + 8, :]       # row 0 = wf1^T, rows 1..7 zero pad
    b0 = b_ref[0:1, :]
    b1 = b_ref[1:2, :]
    bf0 = b_ref[2:3, :]
    bf1 = b_ref[3:4, 0:1]
    pool_sel = pool_ref[...]                  # (16, 256) bf16 constant 0/1 selector

    # Only the 8 diagonal 32x32 blocks of the scratch are ever rewritten, so
    # zeroing once per grid step (32 vector stores) keeps the off-diagonal
    # exactly zero.  (Done per step, not under program_id==0, so it is also
    # correct when the parallel grid axis is split across TensorCores.)
    a_sc[...] = jnp.zeros_like(a_sc)

    def tile_body(t, carry):
        # expand compact per-pair adjacency into the block-diagonal scratch
        a_t = a_ref[t]                                        # (PAIRS, 32, 32) bf16
        for p in range(PAIRS):
            a_sc[p * NN:(p + 1) * NN, p * NN:(p + 1) * NN] = a_t[p]

        # ---- RGIN layer 0: D_IN -> HIDDEN (one 256x256 matmul) --------------
        agg = jnp.dot(a_sc[...], x_ref[t], preferred_element_type=jnp.float32)
        h = jnp.dot(agg.astype(jnp.bfloat16), w0,
                    preferred_element_type=jnp.float32) + b0
        h = jnp.maximum(h, 0.0)

        # ---- RGIN layer 1: HIDDEN -> HIDDEN ----------------------------------
        agg = jnp.dot(a_sc[...], h.astype(jnp.bfloat16),
                      preferred_element_type=jnp.float32)
        h = jnp.dot(agg.astype(jnp.bfloat16), w1,
                    preferred_element_type=jnp.float32) + b1
        h = jnp.maximum(h, 0.0)                               # (256, 32) f32

        # ---- masked mean pool: bf16 0/1 matmul + exact f32 1/n scale ---------
        hm = (h * mask_ref[t]).astype(jnp.bfloat16)           # zero padded rows
        pooled = jnp.dot(pool_sel, hm, preferred_element_type=jnp.float32)
        pooled = pooled * invn_ref[t]                         # (16, 32) f32

        r0 = pl.multiple_of(t * PAIRS, PAIRS)
        p1_sc[pl.ds(r0, PAIRS), :] = pooled[:PAIRS, :]        # graph-1 means
        p2_sc[pl.ds(r0, PAIRS), :] = pooled[PAIRS:, :]        # graph-2 means
        return carry

    lax.fori_loop(0, T, tile_body, 0)

    # ---- FCL + sigmoid once per grid step over all T*PAIRS pairs -------------
    # concat([h1, h2]) @ wf0 done as split matmuls (no lane concatenate)
    hg1 = p1_sc[...].astype(jnp.bfloat16)
    hg2 = p2_sc[...].astype(jnp.bfloat16)
    z = (jnp.dot(hg1, wf0a, preferred_element_type=jnp.float32)
         + jnp.dot(hg2, wf0b, preferred_element_type=jnp.float32) + bf0)
    z = jnp.maximum(z, 0.0)                                   # (TP, 32) f32
    # lane-dense logits: (8, 32) @ (TP, 32)^T -> (8, TP); row 0 is the real wf1
    logit8 = lax.dot_general(wf1r8, z.astype(jnp.bfloat16),
                             (((1,), (1,)), ((), ())),
                             preferred_element_type=jnp.float32)
    out_ref[...] = jax.nn.sigmoid(logit8 + bf1).reshape(1, 8, TP)


def hgmn_forward(x_all, a_cmp, mask, invn, pool_sel, w_slab, b_slab,
                 tiles_per_step=4):
    """Batched HGMN scores. Inputs come from build_inputs / pack_params."""
    num_tiles = x_all.shape[0]
    T = int(tiles_per_step)
    assert num_tiles % T == 0, "num_tiles must be a multiple of tiles_per_step"
    grid = num_tiles // T
    TP = T * PAIRS

    def tiled(shape):                    # per-step data blocks
        return pl.BlockSpec(shape, lambda i: (i,) + (0,) * (len(shape) - 1))

    def const(shape):                    # weights: same block every step
        return pl.BlockSpec(shape, lambda i: (0,) * len(shape))

    out = pl.pallas_call(
        hgmn_kernel,
        out_shape=jax.ShapeDtypeStruct((grid, 8, TP), jnp.float32),
        grid=(grid,),
        in_specs=[
            tiled((T, TILE_ROWS, D_IN)),          # x
            tiled((T, PAIRS, NN, NN)),            # compact per-pair adjacency
            tiled((T, TILE_ROWS, 1)),             # real-node row mask (bf16 0/1)
            tiled((T, POOL_ROWS, 1)),             # exact 1/n per (pair, graph) f32
            const((POOL_ROWS, TILE_ROWS)),        # constant 0/1 pooling selector
            const((_W_ROWS, HIDDEN)),             # packed bf16 weights
            const((_B_ROWS, HIDDEN)),             # packed f32 biases
        ],
        out_specs=pl.BlockSpec((1, 8, TP), lambda i: (i, 0, 0)),
        scratch_shapes=[
            pltpu.VMEM((TILE_ROWS, TILE_ROWS), jnp.bfloat16),   # block-diag A
            pltpu.VMEM((TP, HIDDEN), jnp.float32),              # graph-1 means
            pltpu.VMEM((TP, HIDDEN), jnp.float32),              # graph-2 means
        ],
        compiler_params=pltpu.CompilerParams(
            dimension_semantics=("parallel",)),
    )(x_all, a_cmp, mask, invn, pool_sel, w_slab, b_slab)

    # row 0 of the (8, TP) block holds the scores; rows 1..7 are the zero-pad
    # rows of wf1 (written only to keep the store sublane-aligned & lane-dense).
    return out[:, 0, :].reshape(-1, 1)


# ---------------- plain-JAX glue: compact batched inputs ----------------
def _pair_adjacency(src, dst):
    """(B, MAX_NUMS, MAX_NUMS) edge-count adjacency, messages flow src -> dst."""
    Bb, E = src.shape
    b_idx = jnp.broadcast_to(jnp.arange(Bb, dtype=jnp.int32)[:, None], (Bb, E))
    A = jnp.zeros((Bb, MAX_NUMS, MAX_NUMS), jnp.float32)
    return A.at[b_idx, dst, src].add(1.0)


def build_inputs(x1, n1, src1, dst1, x2, n2, src2, dst2):
    """Build compact kernel inputs.

    x1, x2 : (B, MAX_NUMS, D_IN) zero-padded node features.
    n1, n2 : (B,) int32 real-node counts (>= 1).
    src/dst: (B, E) int32 edge endpoints (must already be < n for that graph).
    """
    B = x1.shape[0]
    assert B % PAIRS == 0
    num_tiles = B // PAIRS

    A1 = _pair_adjacency(src1, dst1)
    A2 = _pair_adjacency(src2, dst2)

    # fused per-pair adjacency: block_diag(A1, A2) + (1+eps)*I (relations summed;
    # the GIN self-term is folded into the diagonal).  Counts are bf16-exact.
    A_pair = jnp.zeros((B, NN, NN), jnp.float32)
    A_pair = A_pair.at[:, :MAX_NUMS, :MAX_NUMS].set(A1)
    A_pair = A_pair.at[:, MAX_NUMS:, MAX_NUMS:].set(A2)
    A_pair = A_pair + (1.0 + GIN_EPS) * jnp.eye(NN, dtype=jnp.float32)
    a_cmp = A_pair.reshape(num_tiles, PAIRS, NN, NN).astype(jnp.bfloat16)

    # fused node features
    x_pair = jnp.concatenate([x1, x2], axis=1)                 # (B, NN, D_IN)
    x_all = x_pair.reshape(num_tiles, TILE_ROWS, D_IN).astype(jnp.bfloat16)

    # per-row real-node mask (0/1, bf16-exact) + exact f32 1/n per (pair, graph)
    idx = jnp.arange(MAX_NUMS, dtype=jnp.int32)[None, :]
    m1 = (idx < n1[:, None]).astype(jnp.float32)
    m2 = (idx < n2[:, None]).astype(jnp.float32)
    mask = jnp.concatenate([m1, m2], axis=1)                   # (B, NN)
    mask = mask.reshape(num_tiles, TILE_ROWS, 1).astype(jnp.bfloat16)

    inv1 = 1.0 / jnp.maximum(n1, 1).astype(jnp.float32)
    inv2 = 1.0 / jnp.maximum(n2, 1).astype(jnp.float32)
    invn = jnp.concatenate([inv1.reshape(num_tiles, PAIRS),
                            inv2.reshape(num_tiles, PAIRS)], axis=1)
    invn = invn.reshape(num_tiles, POOL_ROWS, 1)

    # constant 0/1 sum-pool selection matrix (identical for every tile, ships once)
    base = jnp.zeros((2, NN), jnp.float32)
    base = base.at[0, :MAX_NUMS].set(1.0)
    base = base.at[1, MAX_NUMS:].set(1.0)
    pool_sel = base[:, None, None, :] * jnp.eye(PAIRS, dtype=jnp.float32)[None, :, :, None]
    pool_sel = pool_sel.reshape(POOL_ROWS, TILE_ROWS).astype(jnp.bfloat16)

    return x_all, a_cmp, mask, invn, pool_sel


def pack_params(params):
    """Pack the 9 weight/bias tensors into one bf16 slab + one f32 slab."""
    w_slab = jnp.concatenate([
        params["w0"],                  # rows   0..8
        params["w1"],                  # rows   8..40
        params["wf0"][:HIDDEN, :],     # rows  40..72
        params["wf0"][HIDDEN:, :],     # rows  72..104
        params["wf1"].T,               # row  104
    ], axis=0)
    pad = _W_ROWS - w_slab.shape[0]
    w_slab = jnp.concatenate(
        [w_slab, jnp.zeros((pad, HIDDEN), w_slab.dtype)], axis=0).astype(jnp.bfloat16)

    bf1_row = jnp.zeros((1, HIDDEN), jnp.float32).at[0, 0].set(params["bf1"][0, 0])
    b_slab = jnp.concatenate(
        [params["b0"], params["b1"], params["bf0"], bf1_row,
         jnp.zeros((_B_ROWS - 4, HIDDEN), jnp.float32)], axis=0)
    return w_slab, b_slab


def init_params(key):
    ks = jax.random.split(key, 4)
    s = 0.1
    return {
        "w0":  s * jax.random.normal(ks[0], (D_IN, HIDDEN), jnp.float32),
        "b0":  jnp.zeros((1, HIDDEN), jnp.float32),
        "w1":  s * jax.random.normal(ks[1], (HIDDEN, HIDDEN), jnp.float32),
        "b1":  jnp.zeros((1, HIDDEN), jnp.float32),
        "wf0": s * jax.random.normal(ks[2], (2 * HIDDEN, HIDDEN), jnp.float32),
        "bf0": jnp.zeros((1, HIDDEN), jnp.float32),
        "wf1": s * jax.random.normal(ks[3], (HIDDEN, 1), jnp.float32),
        "bf1": jnp.zeros((1, 1), jnp.float32),
    }


def hgmn_reference(x1, n1, src1, dst1, x2, n2, src2, dst2, params):
    """Plain-JAX f32 reference of the same forward pass (for validation)."""
    eye = (1.0 + GIN_EPS) * jnp.eye(MAX_NUMS, dtype=jnp.float32)

    def gin_pool(x, n, src, dst):
        A = _pair_adjacency(src, dst) + eye[None]
        h = jax.nn.relu(jnp.einsum("bij,bjf->bif", A, x) @ params["w0"] + params["b0"])
        h = jax.nn.relu(jnp.einsum("bij,bjf->bif", A, h) @ params["w1"] + params["b1"])
        m = (jnp.arange(MAX_NUMS)[None, :] < n[:, None]).astype(jnp.float32)
        return (h * m[..., None]).sum(axis=1) / jnp.maximum(n, 1).astype(jnp.float32)[:, None]

    h1 = gin_pool(x1, n1, src1, dst1)
    h2 = gin_pool(x2, n2, src2, dst2)
    z = jax.nn.relu(h1 @ params["wf0"][:HIDDEN] + h2 @ params["wf0"][HIDDEN:]
                    + params["bf0"])
    return jax.nn.sigmoid(z @ params["wf1"] + params["bf1"])


if __name__ == "__main__":
    key = jax.random.PRNGKey(0)
    B = 128           # graph pairs in the batch (= PAIRS * T * grid_steps)
    E = 24            # edges per graph
    T = 4             # tiles per grid step (demo-sized; use 16-64 in production)

    ks = jax.random.split(key, 9)
    n1 = jax.random.randint(ks[0], (B,), 4, MAX_NUMS + 1, jnp.int32)
    n2 = jax.random.randint(ks[1], (B,), 4, MAX_NUMS + 1, jnp.int32)

    node_idx = jnp.arange(MAX_NUMS)[None, :, None]
    x1 = jax.random.normal(ks[2], (B, MAX_NUMS, D_IN), jnp.float32)
    x2 = jax.random.normal(ks[3], (B, MAX_NUMS, D_IN), jnp.float32)
    x1 = jnp.where(node_idx < n1[:, None, None], x1, 0.0)
    x2 = jnp.where(node_idx < n2[:, None, None], x2, 0.0)

    def rand_edges(k, n):
        s = jax.random.randint(k, (2, B, E), 0, MAX_NUMS, jnp.int32)
        return s[0] % n[:, None], s[1] % n[:, None]

    src1, dst1 = rand_edges(ks[4], n1)
    src2, dst2 = rand_edges(ks[5], n2)
    # edge types are generated for fidelity but, with no per-relation weights,
    # sum_r A_r equals the total adjacency and they do not change the result.
    _edge_type_1 = jax.random.randint(ks[6], (B, E), 0, N_REL, jnp.int32)
    _edge_type_2 = jax.random.randint(ks[7], (B, E), 0, N_REL, jnp.int32)

    params = init_params(ks[8])
    x_all, a_cmp, mask, invn, pool_sel = build_inputs(
        x1, n1, src1, dst1, x2, n2, src2, dst2)
    w_slab, b_slab = pack_params(params)

    fwd = jax.jit(functools.partial(hgmn_forward, tiles_per_step=T))
    score = fwd(x_all, a_cmp, mask, invn, pool_sel, w_slab, b_slab)
    jax.block_until_ready(score)

    assert score.shape == (B, 1)
    assert bool(jnp.isfinite(score).all())
    assert bool(((score >= 0.0) & (score <= 1.0)).all())

    # validate against the f32 reference (kernel runs in bf16 -> loose tolerance)
    ref = hgmn_reference(x1, n1, src1, dst1, x2, n2, src2, dst2, params)
    err = jnp.abs(score - ref)
    assert bool(jnp.mean(err) < 2e-2), float(jnp.mean(err))
    assert bool(jnp.max(err) < 1e-1), float(jnp.max(err))
    print("KERNEL_OK")
</pallas_src>

<mosaic_0001>
module attributes {stable_mosaic.version = 11 : i64} {
  func.func @hgmn_kernel(%arg0: i32, %arg1: memref<4x256x8xbf16, #tpu.memory_space<vmem>>, %arg2: memref<4x8x32x32xbf16, #tpu.memory_space<vmem>>, %arg3: memref<4x256x1xbf16, #tpu.memory_space<vmem>>, %arg4: memref<4x16x1xf32, #tpu.memory_space<vmem>>, %arg5: memref<16x256xbf16, #tpu.memory_space<vmem>>, %arg6: memref<112x32xbf16, #tpu.memory_space<vmem>>, %arg7: memref<8x32xf32, #tpu.memory_space<vmem>>, %arg8: memref<1x8x32xf32, #tpu.memory_space<vmem>>, %arg9: memref<256x256xbf16, #tpu.memory_space<vmem>>, %arg10: memref<32x32xf32, #tpu.memory_space<vmem>>, %arg11: memref<32x32xf32, #tpu.memory_space<vmem>>) attributes {dimension_semantics = [#tpu.dimension_semantics<parallel>], iteration_bounds = array<i64: 4>, scalar_prefetch = 0 : i64, scratch_operands = 3 : i64, tpu.core_type = #tpu.core_type<tc>, window_params = [{transform_indices = @transform_0, window_bounds = array<i64: 4, 256, 8>}, {transform_indices = @transform_1, window_bounds = array<i64: 4, 8, 32, 32>}, {transform_indices = @transform_2, window_bounds = array<i64: 4, 256, 1>}, {transform_indices = @transform_3, window_bounds = array<i64: 4, 16, 1>}, {pipeline_mode = #tpu.pipeline_mode<synchronous>, transform_indices = @transform_4, window_bounds = array<i64: 16, 256>}, {pipeline_mode = #tpu.pipeline_mode<synchronous>, transform_indices = @transform_5, window_bounds = array<i64: 112, 32>}, {pipeline_mode = #tpu.pipeline_mode<synchronous>, transform_indices = @transform_6, window_bounds = array<i64: 8, 32>}, {transform_indices = @transform_7, window_bounds = array<i64: 1, 8, 32>}]} {
    %c0 = arith.constant 0 : index
    %c0_0 = arith.constant 0 : index
    %0 = vector.load %arg6[%c0, %c0_0] : memref<112x32xbf16, #tpu.memory_space<vmem>>, vector<112x32xbf16>
    %1 = vector.extract_strided_slice %0 {offsets = [0, 0], sizes = [8, 32], strides = [1, 1]} : vector<112x32xbf16> to vector<8x32xbf16>
    %2 = vector.extract_strided_slice %0 {offsets = [8, 0], sizes = [32, 32], strides = [1, 1]} : vector<112x32xbf16> to vector<32x32xbf16>
    %3 = vector.extract_strided_slice %0 {offsets = [40, 0], sizes = [32, 32], strides = [1, 1]} : vector<112x32xbf16> to vector<32x32xbf16>
    %4 = vector.extract_strided_slice %0 {offsets = [72, 0], sizes = [32, 32], strides = [1, 1]} : vector<112x32xbf16> to vector<32x32xbf16>
    %5 = vector.extract_strided_slice %0 {offsets = [104, 0], sizes = [8, 32], strides = [1, 1]} : vector<112x32xbf16> to vector<8x32xbf16>
    %c0_1 = arith.constant 0 : index
    %c0_2 = arith.constant 0 : index
    %6 = vector.load %arg7[%c0_1, %c0_2] : memref<8x32xf32, #tpu.memory_space<vmem>>, vector<1x32xf32>
    %c1 = arith.constant 1 : index
    %c0_3 = arith.constant 0 : index
    %7 = vector.load %arg7[%c1, %c0_3] : memref<8x32xf32, #tpu.memory_space<vmem>>, vector<1x32xf32>
    %c2 = arith.constant 2 : index
    %c0_4 = arith.constant 0 : index
    %8 = vector.load %arg7[%c2, %c0_4] : memref<8x32xf32, #tpu.memory_space<vmem>>, vector<1x32xf32>
    %c3 = arith.constant 3 : index
    %c0_5 = arith.constant 0 : index
    %9 = vector.load %arg7[%c3, %c0_5] : memref<8x32xf32, #tpu.memory_space<vmem>>, vector<1x1xf32>
    %c0_6 = arith.constant 0 : index
    %c0_7 = arith.constant 0 : index
    %10 = vector.load %arg5[%c0_6, %c0_7] : memref<16x256xbf16, #tpu.memory_space<vmem>>, vector<16x256xbf16>
    %cst = arith.constant 0.000000e+00 : bf16
    %11 = vector.broadcast %cst : bf16 to vector<256x256xbf16>
    %c0_8 = arith.constant 0 : index
    %c0_9 = arith.constant 0 : index
    %12 = vector.load %arg9[%c0_8, %c0_9] : memref<256x256xbf16, #tpu.memory_space<vmem>>, vector<256x256xbf16>
    tpu.vector_store %arg9[%c0_8, %c0_9], %11 {strides = array<i32>} : memref<256x256xbf16, #tpu.memory_space<vmem>>, vector<256x256xbf16>,
    %c0_i32 = arith.constant 0 : i32
    %c4_i32 = arith.constant 4 : i32
    %13 = arith.addi %c0_i32, %c4_i32 : i32
    %c1_i32 = arith.constant 1 : i32
    scf.for %arg12 = %c0_i32 to %13 step %c1_i32  : i32 {
      %36 = arith.index_cast %arg12 : i32 to index
      %c0_23 = arith.constant 0 : index
      %c0_24 = arith.constant 0 : index
      %c0_25 = arith.constant 0 : index
      %37 = vector.load %arg2[%36, %c0_23, %c0_24, %c0_25] : memref<4x8x32x32xbf16, #tpu.memory_space<vmem>>, vector<1x8x32x32xbf16>
      %38 = vector.shape_cast %37 : vector<1x8x32x32xbf16> to vector<8x32x32xbf16>
      %39 = vector.extract_strided_slice %38 {offsets = [0, 0, 0], sizes = [1, 32, 32], strides = [1, 1, 1]} : vector<8x32x32xbf16> to vector<1x32x32xbf16>
      %40 = vector.shape_cast %39 : vector<1x32x32xbf16> to vector<32x32xbf16>
      %c0_26 = arith.constant 0 : index
      %c0_27 = arith.constant 0 : index
      %41 = vector.load %arg9[%c0_26, %c0_27] : memref<256x256xbf16, #tpu.memory_space<vmem>>, vector<32x32xbf16>
      tpu.vector_store %arg9[%c0_26, %c0_27], %40 {strides = array<i32>} : memref<256x256xbf16, #tpu.memory_space<vmem>>, vector<32x32xbf16>,
      %42 = vector.extract_strided_slice %38 {offsets = [1, 0, 0], sizes = [1, 32, 32], strides = [1, 1, 1]} : vector<8x32x32xbf16> to vector<1x32x32xbf16>
      %43 = vector.shape_cast %42 : vector<1x32x32xbf16> to vector<32x32xbf16>
      %c32 = arith.constant 32 : index
      %c32_28 = arith.constant 32 : index
      %44 = vector.load %arg9[%c32, %c32_28] : memref<256x256xbf16, #tpu.memory_space<vmem>>, vector<32x32xbf16>
      tpu.vector_store %arg9[%c32, %c32_28], %43 {strides = array<i32>} : memref<256x256xbf16, #tpu.memory_space<vmem>>, vector<32x32xbf16>,
      %45 = vector.extract_strided_slice %38 {offsets = [2, 0, 0], sizes = [1, 32, 32], strides = [1, 1, 1]} : vector<8x32x32xbf16> to vector<1x32x32xbf16>
      %46 = vector.shape_cast %45 : vector<1x32x32xbf16> to vector<32x32xbf16>
      %c64 = arith.constant 64 : index
      %c64_29 = arith.constant 64 : index
      %47 = vector.load %arg9[%c64, %c64_29] : memref<256x256xbf16, #tpu.memory_space<vmem>>, vector<32x32xbf16>
      tpu.vector_store %arg9[%c64, %c64_29], %46 {strides = array<i32>} : memref<256x256xbf16, #tpu.memory_space<vmem>>, vector<32x32xbf16>,
      %48 = vector.extract_strided_slice %38 {offsets = [3, 0, 0], sizes = [1, 32, 32], strides = [1, 1, 1]} : vector<8x32x32xbf16> to vector<1x32x32xbf16>
      %49 = vector.shape_cast %48 : vector<1x32x32xbf16> to vector<32x32xbf16>
      %c96 = arith.constant 96 : index
      %c96_30 = arith.constant 96 : index
      %50 = vector.load %arg9[%c96, %c96_30] : memref<256x256xbf16, #tpu.memory_space<vmem>>, vector<32x32xbf16>
      tpu.vector_store %arg9[%c96, %c96_30], %49 {strides = array<i32>} : memref<256x256xbf16, #tpu.memory_space<vmem>>, vector<32x32xbf16>,
      %51 = vector.extract_strided_slice %38 {offsets = [4, 0, 0], sizes = [1, 32, 32], strides = [1, 1, 1]} : vector<8x32x32xbf16> to vector<1x32x32xbf16>
      %52 = vector.shape_cast %51 : vector<1x32x32xbf16> to vector<32x32xbf16>
      %c128 = arith.constant 128 : index
      %c128_31 = arith.constant 128 : index
      %53 = vector.load %arg9[%c128, %c128_31] : memref<256x256xbf16, #tpu.memory_space<vmem>>, vector<32x32xbf16>
      tpu.vector_store %arg9[%c128, %c128_31], %52 {strides = array<i32>} : memref<256x256xbf16, #tpu.memory_space<vmem>>, vector<32x32xbf16>,
      %54 = vector.extract_strided_slice %38 {offsets = [5, 0, 0], sizes = [1, 32, 32], strides = [1, 1, 1]} : vector<8x32x32xbf16> to vector<1x32x32xbf16>
      %55 = vector.shape_cast %54 : vector<1x32x32xbf16> to vector<32x32xbf16>
      %c160 = arith.constant 160 : index
      %c160_32 = arith.constant 160 : index
      %56 = vector.load %arg9[%c160, %c160_32] : memref<256x256xbf16, #tpu.memory_space<vmem>>, vector<32x32xbf16>
      tpu.vector_store %arg9[%c160, %c160_32], %55 {strides = array<i32>} : memref<256x256xbf16, #tpu.memory_space<vmem>>, vector<32x32xbf16>,
      %57 = vector.extract_strided_slice %38 {offsets = [6, 0, 0], sizes = [1, 32, 32], strides = [1, 1, 1]} : vector<8x32x32xbf16> to vector<1x32x32xbf16>
      %58 = vector.shape_cast %57 : vector<1x32x32xbf16> to vector<32x32xbf16>
      %c192 = arith.constant 192 : index
      %c192_33 = arith.constant 192 : index
      %59 = vector.load %arg9[%c192, %c192_33] : memref<256x256xbf16, #tpu.memory_space<vmem>>, vector<32x32xbf16>
      tpu.vector_store %arg9[%c192, %c192_33], %58 {strides = array<i32>} : memref<256x256xbf16, #tpu.memory_space<vmem>>, vector<32x32xbf16>,
      %60 = vector.extract_strided_slice %38 {offsets = [7, 0, 0], sizes = [1, 32, 32], strides = [1, 1, 1]} : vector<8x32x32xbf16> to vector<1x32x32xbf16>
      %61 = vector.shape_cast %60 : vector<1x32x32xbf16> to vector<32x32xbf16>
      %c224 = arith.constant 224 : index
      %c224_34 = arith.constant 224 : index
      %62 = vector.load %arg9[%c224, %c224_34] : memref<256x256xbf16, #tpu.memory_space<vmem>>, vector<32x32xbf16>
      tpu.vector_store %arg9[%c224, %c224_34], %61 {strides = array<i32>} : memref<256x256xbf16, #tpu.memory_space<vmem>>, vector<32x32xbf16>,
      %c0_35 = arith.constant 0 : index
      %c0_36 = arith.constant 0 : index
      %63 = vector.load %arg9[%c0_35, %c0_36] : memref<256x256xbf16, #tpu.memory_space<vmem>>, vector<256x256xbf16>
      %64 = arith.index_cast %arg12 : i32 to index
      %c0_37 = arith.constant 0 : index
      %c0_38 = arith.constant 0 : index
      %65 = vector.load %arg1[%64, %c0_37, %c0_38] : memref<4x256x8xbf16, #tpu.memory_space<vmem>>, vector<1x256x8xbf16>
      %66 = vector.shape_cast %65 : vector<1x256x8xbf16> to vector<256x8xbf16>
      %cst_39 = arith.constant dense<0.000000e+00> : vector<256x8xf32>
      %67 = tpu.matmul %63, %66, %cst_39 {dimension_numbers = #tpu.dot_dimension_numbers<[1], [0], [0], [1], [0, 0, 1, 1], [], []>} : vector<256x256xbf16>, vector<256x8xbf16>, vector<256x8xf32> -> vector<256x8xf32>
      %68 = arith.truncf %67 : vector<256x8xf32> to vector<256x8xbf16>
      %cst_40 = arith.constant dense<0.000000e+00> : vector<256x32xf32>
      %69 = tpu.matmul %68, %1, %cst_40 {dimension_numbers = #tpu.dot_dimension_numbers<[1], [0], [0], [1], [0, 0, 1, 1], [], []>} : vector<256x8xbf16>, vector<8x32xbf16>, vector<256x32xf32> -> vector<256x32xf32>
      %70 = vector.broadcast %6 : vector<1x32xf32> to vector<256x32xf32>
      %71 = arith.addf %69, %70 : vector<256x32xf32>
      %cst_41 = arith.constant 0.000000e+00 : f32
      %72 = vector.broadcast %cst_41 : f32 to vector<256x32xf32>
      %73 = arith.maximumf %71, %72 : vector<256x32xf32>
      %c0_42 = arith.constant 0 : index
      %c0_43 = arith.constant 0 : index
      %74 = vector.load %arg9[%c0_42, %c0_43] : memref<256x256xbf16, #tpu.memory_space<vmem>>, vector<256x256xbf16>
      %75 = arith.truncf %73 : vector<256x32xf32> to vector<256x32xbf16>
      %cst_44 = arith.constant dense<0.000000e+00> : vector<256x32xf32>
      %76 = tpu.matmul %74, %75, %cst_44 {dimension_numbers = #tpu.dot_dimension_numbers<[1], [0], [0], [1], [0, 0, 1, 1], [], []>} : vector<256x256xbf16>, vector<256x32xbf16>, vector<256x32xf32> -> vector<256x32xf32>
      %77 = arith.truncf %76 : vector<256x32xf32> to vector<256x32xbf16>
      %cst_45 = arith.constant dense<0.000000e+00> : vector<256x32xf32>
      %78 = tpu.matmul %77, %2, %cst_45 {dimension_numbers = #tpu.dot_dimension_numbers<[1], [0], [0], [1], [0, 0, 1, 1], [], []>} : vector<256x32xbf16>, vector<32x32xbf16>, vector<256x32xf32> -> vector<256x32xf32>
      %79 = vector.broadcast %7 : vector<1x32xf32> to vector<256x32xf32>
      %80 = arith.addf %78, %79 : vector<256x32xf32>
      %cst_46 = arith.constant 0.000000e+00 : f32
      %81 = vector.broadcast %cst_46 : f32 to vector<256x32xf32>
      %82 = arith.maximumf %80, %81 : vector<256x32xf32>
      %83 = arith.index_cast %arg12 : i32 to index
      %c0_47 = arith.constant 0 : index
      %c0_48 = arith.constant 0 : index
      %84 = vector.load %arg3[%83, %c0_47, %c0_48] : memref<4x256x1xbf16, #tpu.memory_space<vmem>>, vector<1x256x1xbf16>
      %85 = vector.shape_cast %84 : vector<1x256x1xbf16> to vector<256x1xbf16>
      %86 = arith.extf %85 : vector<256x1xbf16> to vector<256x1xf32>
      %87 = vector.broadcast %86 : vector<256x1xf32> to vector<256x32xf32>
      %88 = arith.mulf %82, %87 : vector<256x32xf32>
      %89 = arith.truncf %88 : vector<256x32xf32> to vector<256x32xbf16>
      %cst_49 = arith.constant dense<0.000000e+00> : vector<16x32xf32>
      %90 = tpu.matmul %10, %89, %cst_49 {dimension_numbers = #tpu.dot_dimension_numbers<[1], [0], [0], [1], [0, 0, 1, 1], [], []>} : vector<16x256xbf16>, vector<256x32xbf16>, vector<16x32xf32> -> vector<16x32xf32>
      %91 = arith.index_cast %arg12 : i32 to index
      %c0_50 = arith.constant 0 : index
      %c0_51 = arith.constant 0 : index
      %92 = vector.load %arg4[%91, %c0_50, %c0_51] : memref<4x16x1xf32, #tpu.memory_space<vmem>>, vector<1x16x1xf32>
      %93 = vector.shape_cast %92 : vector<1x16x1xf32> to vector<16x1xf32>
      %94 = vector.broadcast %93 : vector<16x1xf32> to vector<16x32xf32>
      %95 = arith.mulf %90, %94 : vector<16x32xf32>
      %c8_i32 = arith.constant 8 : i32
      %96 = arith.muli %arg12, %c8_i32 : i32
      %97 = tpu.assume_multiple %96, 8 : i32
      %98 = vector.extract_strided_slice %95 {offsets = [0, 0], sizes = [8, 32], strides = [1, 1]} : vector<16x32xf32> to vector<8x32xf32>
      %99 = arith.index_cast %97 : i32 to index
      %c0_52 = arith.constant 0 : index
      %100 = vector.load %arg10[%99, %c0_52] : memref<32x32xf32, #tpu.memory_space<vmem>>, vector<8x32xf32>
      tpu.vector_store %arg10[%99, %c0_52], %98 {strides = array<i32>} : memref<32x32xf32, #tpu.memory_space<vmem>>, vector<8x32xf32>,
      %101 = vector.extract_strided_slice %95 {offsets = [8, 0], sizes = [8, 32], strides = [1, 1]} : vector<16x32xf32> to vector<8x32xf32>
      %102 = arith.index_cast %97 : i32 to index
      %c0_53 = arith.constant 0 : index
      %103 = vector.load %arg11[%102, %c0_53] : memref<32x32xf32, #tpu.memory_space<vmem>>, vector<8x32xf32>
      tpu.vector_store %arg11[%102, %c0_53], %101 {strides = array<i32>} : memref<32x32xf32, #tpu.memory_space<vmem>>, vector<8x32xf32>,
    }
    %c4_i32_10 = arith.constant 4 : i32
    %c0_11 = arith.constant 0 : index
    %c0_12 = arith.constant 0 : index
    %14 = vector.load %arg10[%c0_11, %c0_12] : memref<32x32xf32, #tpu.memory_space<vmem>>, vector<32x32xf32>
    %15 = arith.truncf %14 : vector<32x32xf32> to vector<32x32xbf16>
    %c0_13 = arith.constant 0 : index
    %c0_14 = arith.constant 0 : index
    %16 = vector.load %arg11[%c0_13, %c0_14] : memref<32x32xf32, #tpu.memory_space<vmem>>, vector<32x32xf32>
    %17 = arith.truncf %16 : vector<32x32xf32> to vector<32x32xbf16>
    %cst_15 = arith.constant dense<0.000000e+00> : vector<32x32xf32>
    %18 = tpu.matmul %15, %3, %cst_15 {dimension_numbers = #tpu.dot_dimension_numbers<[1], [0], [0], [1], [0, 0, 1, 1], [], []>} : vector<32x32xbf16>, vector<32x32xbf16>, vector<32x32xf32> -> vector<32x32xf32>
    %cst_16 = arith.constant dense<0.000000e+00> : vector<32x32xf32>
    %19 = tpu.matmul %17, %4, %cst_16 {dimension_numbers = #tpu.dot_dimension_numbers<[1], [0], [0], [1], [0, 0, 1, 1], [], []>} : vector<32x32xbf16>, vector<32x32xbf16>, vector<32x32xf32> -> vector<32x32xf32>
    %20 = arith.addf %18, %19 : vector<32x32xf32>
    %21 = vector.broadcast %8 : vector<1x32xf32> to vector<32x32xf32>
    %22 = arith.addf %20, %21 : vector<32x32xf32>
    %cst_17 = arith.constant 0.000000e+00 : f32
    %23 = vector.broadcast %cst_17 : f32 to vector<32x32xf32>
    %24 = arith.maximumf %22, %23 : vector<32x32xf32>
    %25 = arith.truncf %24 : vector<32x32xf32> to vector<32x32xbf16>
    %cst_18 = arith.constant dense<0.000000e+00> : vector<8x32xf32>
    %26 = tpu.matmul %5, %25, %cst_18 {dimension_numbers = #tpu.dot_dimension_numbers<[1], [1], [0], [0], [0, 0, 1, 0], [], []>} : vector<8x32xbf16>, vector<32x32xbf16>, vector<8x32xf32> -> vector<8x32xf32>
    %27 = vector.broadcast %9 : vector<1x1xf32> to vector<8x32xf32>
    %28 = arith.addf %26, %27 : vector<8x32xf32>
    %29 = arith.negf %28 : vector<8x32xf32>
    %30 = math.exp %29 : vector<8x32xf32>
    %cst_19 = arith.constant 1.000000e+00 : f32
    %31 = vector.broadcast %cst_19 : f32 to vector<8x32xf32>
    %32 = arith.addf %31, %30 : vector<8x32xf32>
    %33 = arith.divf %31, %32 : vector<8x32xf32>
    %34 = vector.shape_cast %33 : vector<8x32xf32> to vector<1x8x32xf32>
    %c0_20 = arith.constant 0 : index
    %c0_21 = arith.constant 0 : index
    %c0_22 = arith.constant 0 : index
    %35 = vector.load %arg8[%c0_20, %c0_21, %c0_22] : memref<1x8x32xf32, #tpu.memory_space<vmem>>, vector<1x8x32xf32>
    tpu.vector_store %arg8[%c0_20, %c0_21, %c0_22], %34 {strides = array<i32>} : memref<1x8x32xf32, #tpu.memory_space<vmem>>, vector<1x8x32xf32>,
    return
  }
  func.func @transform_0(%arg0: i32) -> (i32, i32, i32) {
    %c0_i32 = arith.constant 0 : i32
    %c0_i32_0 = arith.constant 0 : i32
    %c0_i32_1 = arith.constant 0 : i32
    return %arg0, %c0_i32, %c0_i32_0 : i32, i32, i32
  }
  func.func @transform_1(%arg0: i32) -> (i32, i32, i32, i32) {
    %c0_i32 = arith.constant 0 : i32
    %c0_i32_0 = arith.constant 0 : i32
    %c0_i32_1 = arith.constant 0 : i32
    %c0_i32_2 = arith.constant 0 : i32
    return %arg0, %c0_i32, %c0_i32_0, %c0_i32_1 : i32, i32, i32, i32
  }
  func.func @transform_2(%arg0: i32) -> (i32, i32, i32) {
    %c0_i32 = arith.constant 0 : i32
    %c0_i32_0 = arith.constant 0 : i32
    %c0_i32_1 = arith.constant 0 : i32
    return %arg0, %c0_i32, %c0_i32_0 : i32, i32, i32
  }
  func.func @transform_3(%arg0: i32) -> (i32, i32, i32) {
    %c0_i32 = arith.constant 0 : i32
    %c0_i32_0 = arith.constant 0 : i32
    %c0_i32_1 = arith.constant 0 : i32
    return %arg0, %c0_i32, %c0_i32_0 : i32, i32, i32
  }
  func.func @transform_4(%arg0: i32) -> (i32, i32) {
    %c0_i32 = arith.constant 0 : i32
    %c0_i32_0 = arith.constant 0 : i32
    %c0_i32_1 = arith.constant 0 : i32
    return %c0_i32, %c0_i32_0 : i32, i32
  }
  func.func @transform_5(%arg0: i32) -> (i32, i32) {
    %c0_i32 = arith.constant 0 : i32
    %c0_i32_0 = arith.constant 0 : i32
    %c0_i32_1 = arith.constant 0 : i32
    return %c0_i32, %c0_i32_0 : i32, i32
  }
  func.func @transform_6(%arg0: i32) -> (i32, i32) {
    %c0_i32 = arith.constant 0 : i32
    %c0_i32_0 = arith.constant 0 : i32
    %c0_i32_1 = arith.constant 0 : i32
    return %c0_i32, %c0_i32_0 : i32, i32
  }
  func.func @transform_7(%arg0: i32) -> (i32, i32, i32) {
    %c0_i32 = arith.constant 0 : i32
    %c0_i32_0 = arith.constant 0 : i32
    %c0_i32_1 = arith.constant 0 : i32
    return %arg0, %c0_i32, %c0_i32_0 : i32, i32, i32
  }
}

</mosaic_0001>

<llo_original>
// kernel: squeeze.1
$region0: #{squeeze.1}
  %s0 = inlined_call_operand.vmem [shape: f32[4,32], index: 0, kind: input, shape index: {}]
  %s1 = inlined_call_operand.hbm [shape: f32[128,1], index: 1, kind: output, shape index: {}]
  $region1: #{squeeze.1} parent=0
    #allocation0 [shape = 'u8[512]{0}', space=vmem, size = 0x400, scoped, tag = 'operand span for operand 1']
    #allocation1 [shape = 's32[1]{0}', space=sflag, size = 0x4, scoped, tag = 'scoped memory for squeeze.1']
    #allocation2 [shape = 'u8[4096]{0}', space=vmem, size = 0x1000, scoped, tag = 'scoped mem for output reshape']
    #allocation3 [shape = 'u8[4096]{0}', space=vmem, size = 0x1000, scoped, tag = 'scoped mem for input reshape']
    %2 = vsyncpa [#allocation1], 0
    %s4 = sshll.u32 1, 4
    %s5 = ssub.s32 %s4, 1
    %v6 = vld [vmem:[%s0] sm:%s5]
    %7 = vst [vmem:[#allocation3] sm:%s5] %v6
    %v8 = vld [vmem:[#allocation3] sm:$0x1]
    %vm9 = vcmask 261120
    %10 = vst.msk [vmem:[#allocation2] sm:$0x1] %vm9, %v8
    %s11 = scalar_lea.vmem [#allocation3], 3
    %v12 = vld [vmem:[%s11] sm:$0x1]
    %13 = vrot.lane.b32.xlu0 %v12, 96
    %v14 = vpop.permute.xlu0 %13
    %vm15 = vcmask 1048320
    %16 = vst.msk [vmem:[#allocation2] sm:$0x1] %vm15, %v14
    %s17 = scalar_lea.vmem [#allocation3], 2
    %v18 = vld [vmem:[%s17] sm:$0x1]
    %19 = vrot.lane.b32.xlu0 %v18, 64
    %v20 = vpop.permute.xlu0 %19
    %vm21 = vcmask 785920
    %22 = vst.msk [vmem:[#allocation2] sm:$0x1] %vm21, %v20
    %s23 = scalar_lea.vmem [#allocation3], 1
    %v24 = vld [vmem:[%s23] sm:$0x1]
    %25 = vrot.lane.b32.xlu0 %v24, 32
    %v26 = vpop.permute.xlu0 %25
    %vm27 = vcmask 523520
    %28 = vst.msk [vmem:[#allocation2] sm:$0x1] %vm27, %v26
    %s30 = sshll.u32 1, 1
    %s31 = ssub.s32 %s30, 1
    %v33 = vld [vmem:[#allocation2] sm:%s31]
    %s34 = sshll.u32 1, 1
    %s35 = ssub.s32 %s34, 1
    %36 = vst [vmem:[#allocation0] sm:%s35] %v33
    %s38 = ssub.s32 16, 16
    %39 = vsyncadd [#allocation1], %s38
    %s41 = sshll.u32 [#allocation0], 4
    %s42 = int_to_ptr.vmem [resolvable:$true] %s41
    %44 = dma.vmem_to_hbm [thread:$0]  %s42, 16, %s1, [#allocation1]
    %45 = dma.done [#allocation1], 16
    %46 = vsyncpa [#allocation1], 1

// kernel: hgmn_forward.1
$region0: #{hgmn_forward.1}
  #allocation0 [shape = 'u32[]', space=smem, size = 0x4, offset = 0x4, fixed_abs, tag = 'smem constant byte address 0x4 - core index']
  #allocation1 [shape = 'u32[144,128]{1,0:T(1,128)}', space=vmem, size = 0x12000, scoped, tag = 'internal scratch']
  #allocation2 [shape = 'bf16[256,256]{1,0:T(8,128)(2,1)}', space=vmem, size = 0x20000, scoped, tag = 'scratch operand']
  #allocation3 [shape = 'f32[32,32]{1,0:T(8,128)}', space=vmem, size = 0x4000, scoped, tag = 'scratch operand']
  #allocation4 [shape = 'f32[32,32]{1,0:T(8,128)}', space=vmem, size = 0x4000, scoped, tag = 'scratch operand']
  %s0 = inlined_call_operand.vmem [shape: bf16[16,256,8], index: 0, kind: input, shape index: {}]
  %s1 = inlined_call_operand.vmem [shape: bf16[16,8,32,32], index: 1, kind: input, shape index: {}]
  %s2 = inlined_call_operand.vmem [shape: bf16[16,256,1], index: 2, kind: input, shape index: {}]
  %s3 = inlined_call_operand.vmem [shape: f32[16,16,1], index: 3, kind: input, shape index: {}]
  %s4 = inlined_call_operand.vmem [shape: bf16[16,256], index: 4, kind: input, shape index: {}]
  %s5 = inlined_call_operand.vmem [shape: bf16[112,32], index: 5, kind: input, shape index: {}]
  %s6 = inlined_call_operand.vmem [shape: f32[8,32], index: 6, kind: input, shape index: {}]
  %s7 = inlined_call_operand.vmem [shape: f32[4,8,32], index: 7, kind: output, shape index: {}]
  %s8 = sld [smem:[#allocation0]]
  $region68: #{hgmn_forward.1} parent=0
    _
  %s10 = ssub.s32 1, %s8
  %s11 = scalar_select 0, %s10, %s8
  loop: start=0, step=1, limit=6
  $region2: #{hgmn_forward.1} parent=0 // loop_pre_header
    _
  $region3: #{hgmn_forward.1} parent=0 // loop_header
    %s13 = sphi 0, %s17
    %p14 = scmp.ge.s32.totalorder %s13, 6
    %s23 = sphi 0, %s25
    %s26 = sphi 0, %s23
    %s27 = sphi 0, %s26
    %s43 = sphi 0, %s27
    %s49 = sphi 0, %s51
    %s52 = sphi 0, %s49
    %s53 = sphi 0, %s52
    %s69 = sphi 0, %s53
    %s75 = sphi 0, %s77
    %s78 = sphi 0, %s75
    %s79 = sphi 0, %s78
    %s95 = sphi 0, %s79
    %s101 = sphi 0, %s103
    %s104 = sphi 0, %s101
    %s105 = sphi 0, %s104
    %s121 = sphi 0, %s105
    %s125 = sphi 0, %s125
    %s127 = sphi 0, %s125
    %s128 = sphi 0, %s127
    %s142 = sphi 0, %s128
    %s146 = sphi 0, %s146
    %s148 = sphi 0, %s146
    %s149 = sphi 0, %s148
    %s163 = sphi 0, %s149
    %s167 = sphi 0, %s167
    %s169 = sphi 0, %s167
    %s170 = sphi 0, %s169
    %s184 = sphi 0, %s170
    %s190 = sphi 0, %s192
    %s193 = sphi 0, %s190
    %s194 = sphi 0, %s193
    %s210 = sphi 0, %s194
  $region4: #{hgmn_forward.1} parent=0 // loop_header_branch
    %16 = sbr.rel (%p14) target = $region8
  $region5: #{hgmn_forward.1} parent=0 // loop_body
    %s18 = ssub.s32 %s13, 1
    %s19 = ssub.s32 %s13, 2
    %s20 = sadd.s32 %s13, 1
    %s21 = ssub.s32 %s13, %s20
    %p22 = scmp.eq.s32.totalorder %s21, 0
    %s24 = sadd.s32 %s23, 1
    %s25 = scalar_select %p22, %s23, %s24
    %p28 = pneg %p22
    %p29 = scmp.eq.s32.totalorder %s13, 3
    %p30 = por %p28, %p29
    %p31 = scmp.ne.s32.totalorder %s23, %s26
    %p32 = scmp.eq.s32.totalorder %s13, 0
    %p33 = por %p31, %p32
    %p34 = scmp.ne.s32.totalorder %s23, %s26
    %p35 = scmp.eq.s32.totalorder %s18, 3
    %p36 = por %p34, %p35
    %p37 = scmp.ne.s32.totalorder %s26, %s27
    %p38 = scmp.eq.s32.totalorder %s18, 0
    %p39 = por %p37, %p38
    %p40 = scmp.ne.s32.totalorder %s26, %s27
    %p41 = scmp.eq.s32.totalorder %s19, 3
    %p42 = por %p40, %p41
    %p44 = scmp.ne.s32.totalorder %s27, %s43
    %p45 = scmp.eq.s32.totalorder %s19, 0
    %p46 = por %p44, %p45
    %s47 = ssub.s32 %s13, %s20
    %p48 = scmp.eq.s32.totalorder %s47, 0
    %s50 = sadd.s32 %s49, 1
    %s51 = scalar_select %p48, %s49, %s50
    %p54 = pneg %p48
    %p55 = scmp.eq.s32.totalorder %s13, 3
    %p56 = por %p54, %p55
    %p57 = scmp.ne.s32.totalorder %s49, %s52
    %p58 = scmp.eq.s32.totalorder %s13, 0
    %p59 = por %p57, %p58
    %p60 = scmp.ne.s32.totalorder %s49, %s52
    %p61 = scmp.eq.s32.totalorder %s18, 3
    %p62 = por %p60, %p61
    %p63 = scmp.ne.s32.totalorder %s52, %s53
    %p64 = scmp.eq.s32.totalorder %s18, 0
    %p65 = por %p63, %p64
    %p66 = scmp.ne.s32.totalorder %s52, %s53
    %p67 = scmp.eq.s32.totalorder %s19, 3
    %p68 = por %p66, %p67
    %p70 = scmp.ne.s32.totalorder %s53, %s69
    %p71 = scmp.eq.s32.totalorder %s19, 0
    %p72 = por %p70, %p71
    %s73 = ssub.s32 %s13, %s20
    %p74 = scmp.eq.s32.totalorder %s73, 0
    %s76 = sadd.s32 %s75, 1
    %s77 = scalar_select %p74, %s75, %s76
    %p80 = pneg %p74
    %p81 = scmp.eq.s32.totalorder %s13, 3
    %p82 = por %p80, %p81
    %p83 = scmp.ne.s32.totalorder %s75, %s78
    %p84 = scmp.eq.s32.totalorder %s13, 0
    %p85 = por %p83, %p84
    %p86 = scmp.ne.s32.totalorder %s75, %s78
    %p87 = scmp.eq.s32.totalorder %s18, 3
    %p88 = por %p86, %p87
    %p89 = scmp.ne.s32.totalorder %s78, %s79
    %p90 = scmp.eq.s32.totalorder %s18, 0
    %p91 = por %p89, %p90
    %p92 = scmp.ne.s32.totalorder %s78, %s79
    %p93 = scmp.eq.s32.totalorder %s19, 3
    %p94 = por %p92, %p93
    %p96 = scmp.ne.s32.totalorder %s79, %s95
    %p97 = scmp.eq.s32.totalorder %s19, 0
    %p98 = por %p96, %p97
    %s99 = ssub.s32 %s13, %s20
    %p100 = scmp.eq.s32.totalorder %s99, 0
    %s102 = sadd.s32 %s101, 1
    %s103 = scalar_select %p100, %s101, %s102
    %p106 = pneg %p100
    %p107 = scmp.eq.s32.totalorder %s13, 3
    %p108 = por %p106, %p107
    %p109 = scmp.ne.s32.totalorder %s101, %s104
    %p110 = scmp.eq.s32.totalorder %s13, 0
    %p111 = por %p109, %p110
    %p112 = scmp.ne.s32.totalorder %s101, %s104
    %p113 = scmp.eq.s32.totalorder %s18, 3
    %p114 = por %p112, %p113
    %p115 = scmp.ne.s32.totalorder %s104, %s105
    %p116 = scmp.eq.s32.totalorder %s18, 0
    %p117 = por %p115, %p116
    %p118 = scmp.ne.s32.totalorder %s104, %s105
    %p119 = scmp.eq.s32.totalorder %s19, 3
    %p120 = por %p118, %p119
    %p122 = scmp.ne.s32.totalorder %s105, %s121
    %p123 = scmp.eq.s32.totalorder %s19, 0
    %p124 = por %p122, %p123
    %s126 = sadd.s32 %s125, 1
    %p129 = scmp.eq.s32.totalorder %s13, 3
    %p130 = scmp.ne.s32.totalorder %s125, %s127
    %p131 = scmp.eq.s32.totalorder %s13, 0
    %p132 = por %p130, %p131
    %p133 = scmp.ne.s32.totalorder %s125, %s127
    %p134 = scmp.eq.s32.totalorder %s18, 3
    %p135 = por %p133, %p134
    %p136 = scmp.ne.s32.totalorder %s127, %s128
    %p137 = scmp.eq.s32.totalorder %s18, 0
    %p138 = por %p136, %p137
    %p139 = scmp.ne.s32.totalorder %s127, %s128
    %p140 = scmp.eq.s32.totalorder %s19, 3
    %p141 = por %p139, %p140
    %p143 = scmp.ne.s32.totalorder %s128, %s142
    %p144 = scmp.eq.s32.totalorder %s19, 0
    %p145 = por %p143, %p144
    %s147 = sadd.s32 %s146, 1
    %p150 = scmp.eq.s32.totalorder %s13, 3
    %p151 = scmp.ne.s32.totalorder %s146, %s148
    %p152 = scmp.eq.s32.totalorder %s13, 0
    %p153 = por %p151, %p152
    %p154 = scmp.ne.s32.totalorder %s146, %s148
    %p155 = scmp.eq.s32.totalorder %s18, 3
    %p156 = por %p154, %p155
    %p157 = scmp.ne.s32.totalorder %s148, %s149
    %p158 = scmp.eq.s32.totalorder %s18, 0
    %p159 = por %p157, %p158
    %p160 = scmp.ne.s32.totalorder %s148, %s149
    %p161 = scmp.eq.s32.totalorder %s19, 3
    %p162 = por %p160, %p161
    %p164 = scmp.ne.s32.totalorder %s149, %s163
    %p165 = scmp.eq.s32.totalorder %s19, 0
    %p166 = por %p164, %p165
    %s168 = sadd.s32 %s167, 1
    %p171 = scmp.eq.s32.totalorder %s13, 3
    %p172 = scmp.ne.s32.totalorder %s167, %s169
    %p173 = scmp.eq.s32.totalorder %s13, 0
    %p174 = por %p172, %p173
    %p175 = scmp.ne.s32.totalorder %s167, %s169
    %p176 = scmp.eq.s32.totalorder %s18, 3
    %p177 = por %p175, %p176
    %p178 = scmp.ne.s32.totalorder %s169, %s170
    %p179 = scmp.eq.s32.totalorder %s18, 0
    %p180 = por %p178, %p179
    %p181 = scmp.ne.s32.totalorder %s169, %s170
    %p182 = scmp.eq.s32.totalorder %s19, 3
    %p183 = por %p181, %p182
    %p185 = scmp.ne.s32.totalorder %s170, %s184
    %p186 = scmp.eq.s32.totalorder %s19, 0
    %p187 = por %p185, %p186
    %s188 = ssub.s32 %s13, %s20
    %p189 = scmp.eq.s32.totalorder %s188, 0
    %s191 = sadd.s32 %s190, 1
    %s192 = scalar_select %p189, %s190, %s191
    %p195 = pneg %p189
    %p196 = scmp.eq.s32.totalorder %s13, 3
    %p197 = por %p195, %p196
    %p198 = scmp.ne.s32.totalorder %s190, %s193
    %p199 = scmp.eq.s32.totalorder %s13, 0
    %p200 = por %p198, %p199
    %p201 = scmp.ne.s32.totalorder %s190, %s193
    %p202 = scmp.eq.s32.totalorder %s18, 3
    %p203 = por %p201, %p202
    %p204 = scmp.ne.s32.totalorder %s193, %s194
    %p205 = scmp.eq.s32.totalorder %s18, 0
    %p206 = por %p204, %p205
    %p207 = scmp.ne.s32.totalorder %s193, %s194
    %p208 = scmp.eq.s32.totalorder %s19, 3
    %p209 = por %p207, %p208
    %p211 = scmp.ne.s32.totalorder %s194, %s210
    %p212 = scmp.eq.s32.totalorder %s19, 0
    %p213 = por %p211, %p212
    %p214 = scmp.le.s32.totalorder 1, %s13
    %p215 = scmp.lt.s32.totalorder %s13, 5
    %p216 = pnand %p214, %p215
    %p217 = pneg %p216
    // Predicated region
    $region9: #{hgmn_forward.1} parent=5 // pred_check
      _
    $region10: #{hgmn_forward.1} parent=5 // pred_check_branch
      %219 = sbr.rel (%p216) target = $region12
    $region11: #{hgmn_forward.1} parent=5 // pred_region
      %s220 = ssub.s32 %s13, 1
      // Predicated region
      $region13: #{hgmn_forward.1} parent=11 // pred_check
        %p221 = pneg %p138
      $region14: #{hgmn_forward.1} parent=11 // pred_check_branch
        %223 = sbr.rel (%p221) target = $region16
      $region15: #{hgmn_forward.1} parent=11 // pred_region
        _
      $region16: #{hgmn_forward.1} parent=11 // pred_fallthru
        _
      // Predicated region
      $region17: #{hgmn_forward.1} parent=11 // pred_check
        %p224 = pneg %p159
      $region18: #{hgmn_forward.1} parent=11 // pred_check_branch
        %226 = sbr.rel (%p224) target = $region20
      $region19: #{hgmn_forward.1} parent=11 // pred_region
        _
      $region20: #{hgmn_forward.1} parent=11 // pred_fallthru
        _
      // Predicated region
      $region21: #{hgmn_forward.1} parent=11 // pred_check
        %p227 = pneg %p180
      $region22: #{hgmn_forward.1} parent=11 // pred_check_branch
        %229 = sbr.rel (%p227) target = $region24
      $region23: #{hgmn_forward.1} parent=11 // pred_region
        _
      $region24: #{hgmn_forward.1} parent=11 // pred_fallthru
        _
    $region12: #{hgmn_forward.1} parent=5 // pred_fallthru
      _
    %p230 = scmp.lt.s32.totalorder %s13, 4
    // Predicated region
    $region25: #{hgmn_forward.1} parent=5 // pred_check
      %p231 = pneg %p230
    $region26: #{hgmn_forward.1} parent=5 // pred_check_branch
      %233 = sbr.rel (%p231) target = $region28
    $region27: #{hgmn_forward.1} parent=5 // pred_region
      // Predicated region
      $region29: #{hgmn_forward.1} parent=27 // pred_check
        %p234 = pneg %p33
      $region30: #{hgmn_forward.1} parent=27 // pred_check_branch
        %236 = sbr.rel (%p234) target = $region32
      $region31: #{hgmn_forward.1} parent=27 // pred_region
        %s237 = smul.u32 4, %s13
        %p238 = scmp.lt.s32.totalorder %s237, 15
        %s239 = scalar_select %p238, %s237, 15
        %s240 = smul.addr %s239, 32
        %s241 = smul.addr %s240, 4
        %s242 = scalar_lea.vmem %s0, %s241
        %s243 = smul.u32 4, %s13
      $region32: #{hgmn_forward.1} parent=27 // pred_fallthru
        _
      // Predicated region
      $region33: #{hgmn_forward.1} parent=27 // pred_check
        %p244 = pneg %p59
      $region34: #{hgmn_forward.1} parent=27 // pred_check_branch
        %246 = sbr.rel (%p244) target = $region36
      $region35: #{hgmn_forward.1} parent=27 // pred_region
        %s247 = smul.u32 4, %s13
        %p248 = scmp.lt.s32.totalorder %s247, 15
        %s249 = scalar_select %p248, %s247, 15
        %s250 = smul.addr %s249, 32
        %s251 = smul.addr %s250, 4
        %s252 = scalar_lea.vmem %s1, %s251
        %s253 = smul.u32 4, %s13
      $region36: #{hgmn_forward.1} parent=27 // pred_fallthru
        _
      // Predicated region
      $region37: #{hgmn_forward.1} parent=27 // pred_check
        %p254 = pneg %p85
      $region38: #{hgmn_forward.1} parent=27 // pred_check_branch
        %256 = sbr.rel (%p254) target = $region40
      $region39: #{hgmn_forward.1} parent=27 // pred_region
        %s257 = smul.u32 4, %s13
        %p258 = scmp.lt.s32.totalorder %s257, 15
        %s259 = scalar_select %p258, %s257, 15
        %s260 = smul.addr %s259, 32
        %s261 = smul.addr %s260, 4
        %s262 = scalar_lea.vmem %s2, %s261
        %s263 = smul.u32 4, %s13
      $region40: #{hgmn_forward.1} parent=27 // pred_fallthru
        _
      // Predicated region
      $region41: #{hgmn_forward.1} parent=27 // pred_check
        %p264 = pneg %p111
      $region42: #{hgmn_forward.1} parent=27 // pred_check_branch
        %266 = sbr.rel (%p264) target = $region44
      $region43: #{hgmn_forward.1} parent=27 // pred_region
        %s267 = smul.u32 4, %s13
        %p268 = scmp.lt.s32.totalorder %s267, 15
        %s269 = scalar_select %p268, %s267, 15
        %s270 = smul.addr %s269, 2
        %s271 = smul.addr %s270, 8
        %s272 = scalar_lea.vmem %s3, %s271
        %s273 = smul.u32 4, %s13
      $region44: #{hgmn_forward.1} parent=27 // pred_fallthru
        _
    $region28: #{hgmn_forward.1} parent=5 // pred_fallthru
      _
    %p274 = scmp.le.s32.totalorder 1, %s13
    %p275 = scmp.lt.s32.totalorder %s13, 5
    %p276 = pnand %p274, %p275
    %p277 = pneg %p276
    // Predicated region
    $region45: #{hgmn_forward.1} parent=5 // pred_check
      _
    $region46: #{hgmn_forward.1} parent=5 // pred_check_branch
      %279 = sbr.rel (%p276) target = $region48
    $region47: #{hgmn_forward.1} parent=5 // pred_region
      %s280 = ssub.s32 %s13, 1
      %s281 = smul.u32 4, %s18
      %p282 = scmp.lt.s32.totalorder %s281, 15
      %s283 = scalar_select %p282, %s281, 15
      %s284 = smul.addr %s283, 32
      %s285 = smul.addr %s284, 4
      %s286 = scalar_lea.vmem %s0, %s285
      %p287 = pneg %p39
      %p288 = pneg %p36
      %s289 = smul.u32 4, %s18
      %p290 = scmp.lt.s32.totalorder %s289, 15
      %s291 = scalar_select %p290, %s289, 15
      %s292 = smul.addr %s291, 32
      %s293 = smul.addr %s292, 4
      %s294 = scalar_lea.vmem %s1, %s293
      %p295 = pneg %p65
      %p296 = pneg %p62
      %s297 = smul.u32 4, %s18
      %p298 = scmp.lt.s32.totalorder %s297, 15
      %s299 = scalar_select %p298, %s297, 15
      %s300 = smul.addr %s299, 32
      %s301 = smul.addr %s300, 4
      %s302 = scalar_lea.vmem %s2, %s301
      %p303 = pneg %p91
      %p304 = pneg %p88
      %s305 = smul.u32 4, %s18
      %p306 = scmp.lt.s32.totalorder %s305, 15
      %s307 = scalar_select %p306, %s305, 15
      %s308 = smul.addr %s307, 2
      %s309 = smul.addr %s308, 8
      %s310 = scalar_lea.vmem %s3, %s309
      %p311 = pneg %p117
      %p312 = pneg %p114
      %p313 = pneg %p138
      %p314 = pneg %p135
      %p315 = pneg %p159
      %p316 = pneg %p156
      %p317 = pneg %p180
      %p318 = pneg %p177
      %p319 = pneg %p206
      %p320 = pneg %p203
      %p321 = scmp.lt.s32.totalorder %s18, 3
      %s322 = scalar_select %p321, %s18, 3
      %s323 = smul.addr %s322, 8
      %s324 = scalar_lea.vmem %s7, %s323
      %s325 = smul.u32 4, %s18
      %p326 = scmp.lt.s32.totalorder %s325, 15
      %s327 = scalar_select %p326, %s325, 15
      %s328 = smul.addr %s327, 32
      %s329 = smul.addr %s328, 4
      %s330 = scalar_lea.vmem %s0, %s329
      %s331 = smul.u32 4, %s18
      %s332 = smul.u32 4, %s18
      %p333 = scmp.lt.s32.totalorder %s332, 15
      %s334 = scalar_select %p333, %s332, 15
      %s335 = smul.addr %s334, 32
      %s336 = smul.addr %s335, 4
      %s337 = scalar_lea.vmem %s1, %s336
      %s338 = smul.u32 4, %s18
      %s339 = smul.u32 4, %s18
      %p340 = scmp.lt.s32.totalorder %s339, 15
      %s341 = scalar_select %p340, %s339, 15
      %s342 = smul.addr %s341, 32
      %s343 = smul.addr %s342, 4
      %s344 = scalar_lea.vmem %s2, %s343
      %s345 = smul.u32 4, %s18
      %s346 = smul.u32 4, %s18
      %p347 = scmp.lt.s32.totalorder %s346, 15
      %s348 = scalar_select %p347, %s346, 15
      %s349 = smul.addr %s348, 2
      %s350 = smul.addr %s349, 8
      %s351 = scalar_lea.vmem %s3, %s350
      %s352 = smul.u32 4, %s18
      %p353 = scmp.lt.s32.totalorder %s18, 3
      %s354 = scalar_select %p353, %s18, 3
      %s355 = smul.addr %s354, 8
      %s356 = scalar_lea.vmem %s7, %s355
      %v358 = vld [vmem:[%s5] sm:$0xf]
      %v359 = vld [vmem:[%s5 + $0x4] sm:$0xf]
      %v360 = vld [vmem:[%s5 + $0x8] sm:$0xf]
      %v361 = vld [vmem:[%s5 + $0xc] sm:$0xf]
      %v362 = vld [vmem:[%s5 + $0x10] sm:$0xf]
      %v363 = vld [vmem:[%s5 + $0x14] sm:$0xf]
      %v364 = vld [vmem:[%s5 + $0x18] sm:$0xf]
      %v365 = vld [vmem:[%s5 + $0x1c] sm:$0xf]
      %v366 = vld [vmem:[%s5 + $0x20] sm:$0xf]
      %v367 = vld [vmem:[%s5 + $0x24] sm:$0xf]
      %v368 = vld [vmem:[%s5 + $0x28] sm:$0xf]
      %v369 = vld [vmem:[%s5 + $0x2c] sm:$0xf]
      %v370 = vld [vmem:[%s5 + $0x30] sm:$0xf]
      %v371 = vld [vmem:[%s5 + $0x34] sm:$0xf]
      %v372 = vld [vmem:[%s6] sm:$0x1]
      %v373 = vld [vmem:[%s6 + $0x1] sm:$0x1]
      %v374 = vld [vmem:[%s6 + $0x2] sm:$0x1]
      %v375 = vld [vmem:[%s6 + $0x3] sm:$0x1]
      %v376 = vld [vmem:[%s4] sm:$0xff]
      %v377 = vld [vmem:[%s4 + $0x8] sm:$0xff]
      %378 = vst [vmem:[#allocation2] sm:$0xff] 0
      %379 = vst [vmem:[#allocation2 + $0x8] sm:$0xff] 0
      %380 = vst [vmem:[#allocation2 + $0x10] sm:$0xff] 0
      %381 = vst [vmem:[#allocation2 + $0x18] sm:$0xff] 0
      %382 = vst [vmem:[#allocation2 + $0x20] sm:$0xff] 0
      %383 = vst [vmem:[#allocation2 + $0x28] sm:$0xff] 0
      %384 = vst [vmem:[#allocation2 + $0x30] sm:$0xff] 0
      %385 = vst [vmem:[#allocation2 + $0x38] sm:$0xff] 0
      %386 = vst [vmem:[#allocation2 + $0x40] sm:$0xff] 0
      %387 = vst [vmem:[#allocation2 + $0x48] sm:$0xff] 0
      %388 = vst [vmem:[#allocation2 + $0x50] sm:$0xff] 0
      %389 = vst [vmem:[#allocation2 + $0x58] sm:$0xff] 0
      %390 = vst [vmem:[#allocation2 + $0x60] sm:$0xff] 0
      %391 = vst [vmem:[#allocation2 + $0x68] sm:$0xff] 0
      %392 = vst [vmem:[#allocation2 + $0x70] sm:$0xff] 0
      %393 = vst [vmem:[#allocation2 + $0x78] sm:$0xff] 0
      %394 = vst [vmem:[#allocation2 + $0x80] sm:$0xff] 0
      %395 = vst [vmem:[#allocation2 + $0x88] sm:$0xff] 0
      %396 = vst [vmem:[#allocation2 + $0x90] sm:$0xff] 0
      %397 = vst [vmem:[#allocation2 + $0x98] sm:$0xff] 0
      %398 = vst [vmem:[#allocation2 + $0xa0] sm:$0xff] 0
      %399 = vst [vmem:[#allocation2 + $0xa8] sm:$0xff] 0
      %400 = vst [vmem:[#allocation2 + $0xb0] sm:$0xff] 0
      %401 = vst [vmem:[#allocation2 + $0xb8] sm:$0xff] 0
      %402 = vst [vmem:[#allocation2 + $0xc0] sm:$0xff] 0
      %403 = vst [vmem:[#allocation2 + $0xc8] sm:$0xff] 0
      %404 = vst [vmem:[#allocation2 + $0xd0] sm:$0xff] 0
      %405 = vst [vmem:[#allocation2 + $0xd8] sm:$0xff] 0
      %406 = vst [vmem:[#allocation2 + $0xe0] sm:$0xff] 0
      %407 = vst [vmem:[#allocation2 + $0xe8] sm:$0xff] 0
      %408 = vst [vmem:[#allocation2 + $0xf0] sm:$0xff] 0
      %409 = vst [vmem:[#allocation2 + $0xf8] sm:$0xff] 0
      loop: start=0, step=1, limit=4
      $region49: #{hgmn_forward.1} parent=47 // loop_pre_header
        _
      $region50: #{hgmn_forward.1} parent=47 // loop_header
        %s411 = sphi 0, %s415
        %p412 = scmp.ge.s32.totalorder %s411, 4
      $region51: #{hgmn_forward.1} parent=47 // loop_header_branch
        %414 = sbr.rel (%p412) target = $region55
      $region52: #{hgmn_forward.1} parent=47 // loop_body
        %s416 = smul.u32 %s411, 32
        %s417 = smul.addr %s416, 4
        %s418 = scalar_lea.vmem %s337, %s417
        %v419 = vld [vmem:[%s418] sm:$0xf]
        %v420 = vld [vmem:[%s418 + $0x4] sm:$0xf]
        %v421 = vld [vmem:[%s418 + $0x8] sm:$0xf]
        %v422 = vld [vmem:[%s418 + $0xc] sm:$0xf]
        %v423 = vld [vmem:[%s418 + $0x10] sm:$0xf]
        %v424 = vld [vmem:[%s418 + $0x14] sm:$0xf]
        %v425 = vld [vmem:[%s418 + $0x18] sm:$0xf]
        %v426 = vld [vmem:[%s418 + $0x1c] sm:$0xf]
        %v427 = vld [vmem:[%s418 + $0x20] sm:$0xf]
        %v428 = vld [vmem:[%s418 + $0x24] sm:$0xf]
        %v429 = vld [vmem:[%s418 + $0x28] sm:$0xf]
        %v430 = vld [vmem:[%s418 + $0x2c] sm:$0xf]
        %v431 = vld [vmem:[%s418 + $0x30] sm:$0xf]
        %v432 = vld [vmem:[%s418 + $0x34] sm:$0xf]
        %v433 = vld [vmem:[%s418 + $0x38] sm:$0xf]
        %v434 = vld [vmem:[%s418 + $0x3c] sm:$0xf]
        %v435 = vld [vmem:[%s418 + $0x40] sm:$0xf]
        %v436 = vld [vmem:[%s418 + $0x44] sm:$0xf]
        %v437 = vld [vmem:[%s418 + $0x48] sm:$0xf]
        %v438 = vld [vmem:[%s418 + $0x4c] sm:$0xf]
        %v439 = vld [vmem:[%s418 + $0x50] sm:$0xf]
        %v440 = vld [vmem:[%s418 + $0x54] sm:$0xf]
        %v441 = vld [vmem:[%s418 + $0x58] sm:$0xf]
        %v442 = vld [vmem:[%s418 + $0x5c] sm:$0xf]
        %v443 = vld [vmem:[%s418 + $0x60] sm:$0xf]
        %v444 = vld [vmem:[%s418 + $0x64] sm:$0xf]
        %v445 = vld [vmem:[%s418 + $0x68] sm:$0xf]
        %v446 = vld [vmem:[%s418 + $0x6c] sm:$0xf]
        %v447 = vld [vmem:[%s418 + $0x70] sm:$0xf]
        %v448 = vld [vmem:[%s418 + $0x74] sm:$0xf]
        %v449 = vld [vmem:[%s418 + $0x78] sm:$0xf]
        %v450 = vld [vmem:[%s418 + $0x7c] sm:$0xf]
        %vm451 = vcmask 257024
        %452 = vst.msk [vmem:[#allocation2] sm:$0xf] %vm451, %v419
        %453 = vst.msk [vmem:[#allocation2 + $0x8] sm:$0xf] %vm451, %v420
        %454 = vst.msk [vmem:[#allocation2 + $0x10] sm:$0xf] %vm451, %v421
        %455 = vst.msk [vmem:[#allocation2 + $0x18] sm:$0xf] %vm451, %v422
        %460 = vrot.lane.b32.xlu0 %v423, 32
        %v461 = vpop.permute.xlu0 %460
        %462 = vrot.lane.b32.xlu0 %v424, 32
        %v463 = vpop.permute.xlu0 %462
        %464 = vrot.lane.b32.xlu0 %v425, 32
        %v465 = vpop.permute.xlu0 %464
        %466 = vrot.lane.b32.xlu0 %v426, 32
        %v467 = vpop.permute.xlu0 %466
        %vm472 = vcmask 519424
        %473 = vst.msk [vmem:[#allocation2 + $0x20] sm:$0xf] %vm472, %v461
        %474 = vst.msk [vmem:[#allocation2 + $0x28] sm:$0xf] %vm472, %v463
        %475 = vst.msk [vmem:[#allocation2 + $0x30] sm:$0xf] %vm472, %v465
        %476 = vst.msk [vmem:[#allocation2 + $0x38] sm:$0xf] %vm472, %v467
        %481 = vrot.lane.b32.xlu0 %v427, 64
        %v482 = vpop.permute.xlu0 %481
        %483 = vrot.lane.b32.xlu0 %v428, 64
        %v484 = vpop.permute.xlu0 %483
        %485 = vrot.lane.b32.xlu0 %v429, 64
        %v486 = vpop.permute.xlu0 %485
        %487 = vrot.lane.b32.xlu0 %v430, 64
        %v488 = vpop.permute.xlu0 %487
        %vm493 = vcmask 781824
        %494 = vst.msk [vmem:[#allocation2 + $0x40] sm:$0xf] %vm493, %v482
        %495 = vst.msk [vmem:[#allocation2 + $0x48] sm:$0xf] %vm493, %v484
        %496 = vst.msk [vmem:[#allocation2 + $0x50] sm:$0xf] %vm493, %v486
        %497 = vst.msk [vmem:[#allocation2 + $0x58] sm:$0xf] %vm493, %v488
        %502 = vrot.lane.b32.xlu0 %v431, 96
        %v503 = vpop.permute.xlu0 %502
        %504 = vrot.lane.b32.xlu0 %v432, 96
        %v505 = vpop.permute.xlu0 %504
        %506 = vrot.lane.b32.xlu0 %v433, 96
        %v507 = vpop.permute.xlu0 %506
        %508 = vrot.lane.b32.xlu0 %v434, 96
        %v509 = vpop.permute.xlu0 %508
        %vm514 = vcmask 1044224
        %515 = vst.msk [vmem:[#allocation2 + $0x60] sm:$0xf] %vm514, %v503
        %516 = vst.msk [vmem:[#allocation2 + $0x68] sm:$0xf] %vm514, %v505
        %517 = vst.msk [vmem:[#allocation2 + $0x70] sm:$0xf] %vm514, %v507
        %518 = vst.msk [vmem:[#allocation2 + $0x78] sm:$0xf] %vm514, %v509
        %519 = vst.msk [vmem:[#allocation2 + $0x84] sm:$0xf] %vm451, %v435
        %520 = vst.msk [vmem:[#allocation2 + $0x8c] sm:$0xf] %vm451, %v436
        %521 = vst.msk [vmem:[#allocation2 + $0x94] sm:$0xf] %vm451, %v437
        %522 = vst.msk [vmem:[#allocation2 + $0x9c] sm:$0xf] %vm451, %v438
        %527 = vrot.lane.b32.xlu0 %v439, 32
        %v528 = vpop.permute.xlu0 %527
        %529 = vrot.lane.b32.xlu0 %v440, 32
        %v530 = vpop.permute.xlu0 %529
        %531 = vrot.lane.b32.xlu0 %v441, 32
        %v532 = vpop.permute.xlu0 %531
        %533 = vrot.lane.b32.xlu0 %v442, 32
        %v534 = vpop.permute.xlu0 %533
        %539 = vst.msk [vmem:[#allocation2 + $0xa4] sm:$0xf] %vm472, %v528
        %540 = vst.msk [vmem:[#allocation2 + $0xac] sm:$0xf] %vm472, %v530
        %541 = vst.msk [vmem:[#allocation2 + $0xb4] sm:$0xf] %vm472, %v532
        %542 = vst.msk [vmem:[#allocation2 + $0xbc] sm:$0xf] %vm472, %v534
        %547 = vrot.lane.b32.xlu0 %v443, 64
        %v548 = vpop.permute.xlu0 %547
        %549 = vrot.lane.b32.xlu0 %v444, 64
        %v550 = vpop.permute.xlu0 %549
        %551 = vrot.lane.b32.xlu0 %v445, 64
        %v552 = vpop.permute.xlu0 %551
        %553 = vrot.lane.b32.xlu0 %v446, 64
        %v554 = vpop.permute.xlu0 %553
        %559 = vst.msk [vmem:[#allocation2 + $0xc4] sm:$0xf] %vm493, %v548
        %560 = vst.msk [vmem:[#allocation2 + $0xcc] sm:$0xf] %vm493, %v550
        %561 = vst.msk [vmem:[#allocation2 + $0xd4] sm:$0xf] %vm493, %v552
        %562 = vst.msk [vmem:[#allocation2 + $0xdc] sm:$0xf] %vm493, %v554
        %567 = vrot.lane.b32.xlu0 %v447, 96
        %v568 = vpop.permute.xlu0 %567
        %569 = vrot.lane.b32.xlu0 %v448, 96
        %v570 = vpop.permute.xlu0 %569
        %571 = vrot.lane.b32.xlu0 %v449, 96
        %v572 = vpop.permute.xlu0 %571
        %573 = vrot.lane.b32.xlu0 %v450, 96
        %v574 = vpop.permute.xlu0 %573
        %579 = vst.msk [vmem:[#allocation2 + $0xe4] sm:$0xf] %vm514, %v568
        %580 = vst.msk [vmem:[#allocation2 + $0xec] sm:$0xf] %vm514, %v570
        %581 = vst.msk [vmem:[#allocation2 + $0xf4] sm:$0xf] %vm514, %v572
        %582 = vst.msk [vmem:[#allocation2 + $0xfc] sm:$0xf] %vm514, %v574
        %v583 = vld [vmem:[#allocation2] sm:$0xff]
        %v584 = vld [vmem:[#allocation2 + $0x8] sm:$0xff]
        %v585 = vld [vmem:[#allocation2 + $0x10] sm:$0xff]
        %v586 = vld [vmem:[#allocation2 + $0x18] sm:$0xff]
        %v587 = vld [vmem:[#allocation2 + $0x20] sm:$0xff]
        %v588 = vld [vmem:[#allocation2 + $0x28] sm:$0xff]
        %v589 = vld [vmem:[#allocation2 + $0x30] sm:$0xff]
        %v590 = vld [vmem:[#allocation2 + $0x38] sm:$0xff]
        %v591 = vld [vmem:[#allocation2 + $0x40] sm:$0xff]
        %v592 = vld [vmem:[#allocation2 + $0x48] sm:$0xff]
        %v593 = vld [vmem:[#allocation2 + $0x50] sm:$0xff]
        %v594 = vld [vmem:[#allocation2 + $0x58] sm:$0xff]
        %v595 = vld [vmem:[#allocation2 + $0x60] sm:$0xff]
        %v596 = vld [vmem:[#allocation2 + $0x68] sm:$0xff]
        %v597 = vld [vmem:[#allocation2 + $0x70] sm:$0xff]
        %v598 = vld [vmem:[#allocation2 + $0x78] sm:$0xff]
        %v599 = vld [vmem:[#allocation2 + $0x80] sm:$0xff]
        %v600 = vld [vmem:[#allocation2 + $0x88] sm:$0xff]
        %v601 = vld [vmem:[#allocation2 + $0x90] sm:$0xff]
        %v602 = vld [vmem:[#allocation2 + $0x98] sm:$0xff]
        %v603 = vld [vmem:[#allocation2 + $0xa0] sm:$0xff]
        %v604 = vld [vmem:[#allocation2 + $0xa8] sm:$0xff]
        %v605 = vld [vmem:[#allocation2 + $0xb0] sm:$0xff]
        %v606 = vld [vmem:[#allocation2 + $0xb8] sm:$0xff]
        %v607 = vld [vmem:[#allocation2 + $0xc0] sm:$0xff]
        %v608 = vld [vmem:[#allocation2 + $0xc8] sm:$0xff]
        %v609 = vld [vmem:[#allocation2 + $0xd0] sm:$0xff]
        %v610 = vld [vmem:[#allocation2 + $0xd8] sm:$0xff]
        %v611 = vld [vmem:[#allocation2 + $0xe0] sm:$0xff]
        %v612 = vld [vmem:[#allocation2 + $0xe8] sm:$0xff]
        %v613 = vld [vmem:[#allocation2 + $0xf0] sm:$0xff]
        %v614 = vld [vmem:[#allocation2 + $0xf8] sm:$0xff]
        %s615 = smul.addr %s416, 4
        %s616 = scalar_lea.vmem %s330, %s615
        %v617 = vld [vmem:[%s616] sm:$0xf]
        %v618 = vld [vmem:[%s616 + $0x4] sm:$0xf]
        %v619 = vld [vmem:[%s616 + $0x8] sm:$0xf]
        %v620 = vld [vmem:[%s616 + $0xc] sm:$0xf]
        %v621 = vld [vmem:[%s616 + $0x10] sm:$0xf]
        %v622 = vld [vmem:[%s616 + $0x14] sm:$0xf]
        %v623 = vld [vmem:[%s616 + $0x18] sm:$0xf]
        %v624 = vld [vmem:[%s616 + $0x1c] sm:$0xf]
        %v625 = vld [vmem:[%s616 + $0x20] sm:$0xf]
        %v626 = vld [vmem:[%s616 + $0x24] sm:$0xf]
        %v627 = vld [vmem:[%s616 + $0x28] sm:$0xf]
        %v628 = vld [vmem:[%s616 + $0x2c] sm:$0xf]
        %v629 = vld [vmem:[%s616 + $0x30] sm:$0xf]
        %v630 = vld [vmem:[%s616 + $0x34] sm:$0xf]
        %v631 = vld [vmem:[%s616 + $0x38] sm:$0xf]
        %v632 = vld [vmem:[%s616 + $0x3c] sm:$0xf]
        %v633 = vld [vmem:[%s616 + $0x40] sm:$0xf]
        %v634 = vld [vmem:[%s616 + $0x44] sm:$0xf]
        %v635 = vld [vmem:[%s616 + $0x48] sm:$0xf]
        %v636 = vld [vmem:[%s616 + $0x4c] sm:$0xf]
        %v637 = vld [vmem:[%s616 + $0x50] sm:$0xf]
        %v638 = vld [vmem:[%s616 + $0x54] sm:$0xf]
        %v639 = vld [vmem:[%s616 + $0x58] sm:$0xf]
        %v640 = vld [vmem:[%s616 + $0x5c] sm:$0xf]
        %v641 = vld [vmem:[%s616 + $0x60] sm:$0xf]
        %v642 = vld [vmem:[%s616 + $0x64] sm:$0xf]
        %v643 = vld [vmem:[%s616 + $0x68] sm:$0xf]
        %v644 = vld [vmem:[%s616 + $0x6c] sm:$0xf]
        %v645 = vld [vmem:[%s616 + $0x70] sm:$0xf]
        %v646 = vld [vmem:[%s616 + $0x74] sm:$0xf]
        %v647 = vld [vmem:[%s616 + $0x78] sm:$0xf]
        %v648 = vld [vmem:[%s616 + $0x7c] sm:$0xf]
        %v681 = vunpack.c.l.b16 %v583
        %v682 = vunpack.c.h.b16 %v583
        %v683 = vunpack.c.l.b16 %v584
        %v684 = vunpack.c.h.b16 %v584
        %v685 = vunpack.c.l.b16 %v585
        %v686 = vunpack.c.h.b16 %v585
        %v687 = vunpack.c.l.b16 %v586
        %v688 = vunpack.c.h.b16 %v586
        %v689 = vunpack.c.l.b16 %v587
        %v690 = vunpack.c.h.b16 %v587
        %v691 = vunpack.c.l.b16 %v588
        %v692 = vunpack.c.h.b16 %v588
        %v693 = vunpack.c.l.b16 %v589
        %v694 = vunpack.c.h.b16 %v589
        %v695 = vunpack.c.l.b16 %v590
        %v696 = vunpack.c.h.b16 %v590
        %v697 = vunpack.c.l.b16 %v591
        %v698 = vunpack.c.h.b16 %v591
        %v699 = vunpack.c.l.b16 %v592
        %v700 = vunpack.c.h.b16 %v592
        %v701 = vunpack.c.l.b16 %v593
        %v702 = vunpack.c.h.b16 %v593
        %v703 = vunpack.c.l.b16 %v594
        %v704 = vunpack.c.h.b16 %v594
        %v705 = vunpack.c.l.b16 %v595
        %v706 = vunpack.c.h.b16 %v595
        %v707 = vunpack.c.l.b16 %v596
        %v708 = vunpack.c.h.b16 %v596
        %v709 = vunpack.c.l.b16 %v597
        %v710 = vunpack.c.h.b16 %v597
        %v711 = vunpack.c.l.b16 %v598
        %v712 = vunpack.c.h.b16 %v598
        %v713 = vunpack.c.l.b16 %v599
        %v714 = vunpack.c.h.b16 %v599
        %v715 = vunpack.c.l.b16 %v600
        %v716 = vunpack.c.h.b16 %v600
        %v717 = vunpack.c.l.b16 %v601
        %v718 = vunpack.c.h.b16 %v601
        %v719 = vunpack.c.l.b16 %v602
        %v720 = vunpack.c.h.b16 %v602
        %v721 = vunpack.c.l.b16 %v603
        %v722 = vunpack.c.h.b16 %v603
        %v723 = vunpack.c.l.b16 %v604
        %v724 = vunpack.c.h.b16 %v604
        %v725 = vunpack.c.l.b16 %v605
        %v726 = vunpack.c.h.b16 %v605
        %v727 = vunpack.c.l.b16 %v606
        %v728 = vunpack.c.h.b16 %v606
        %v729 = vunpack.c.l.b16 %v607
        %v730 = vunpack.c.h.b16 %v607
        %v731 = vunpack.c.l.b16 %v608
        %v732 = vunpack.c.h.b16 %v608
        %v733 = vunpack.c.l.b16 %v609
        %v734 = vunpack.c.h.b16 %v609
        %v735 = vunpack.c.l.b16 %v610
        %v736 = vunpack.c.h.b16 %v610
        %v737 = vunpack.c.l.b16 %v611
        %v738 = vunpack.c.h.b16 %v611
        %v739 = vunpack.c.l.b16 %v612
        %v740 = vunpack.c.h.b16 %v612
        %v741 = vunpack.c.l.b16 %v613
        %v742 = vunpack.c.h.b16 %v613
        %v743 = vunpack.c.l.b16 %v614
        %v744 = vunpack.c.h.b16 %v614
        %v745 = vpack.c.b16 %v683, %v681
        %v746 = vpack.c.b16 %v684, %v682
        %v747 = vpack.c.b16 %v687, %v685
        %v748 = vpack.c.b16 %v688, %v686
        %v749 = vpack.c.b16 %v691, %v689
        %v750 = vpack.c.b16 %v692, %v690
        %v751 = vpack.c.b16 %v695, %v693
        %v752 = vpack.c.b16 %v696, %v694
        %v753 = vpack.c.b16 %v699, %v697
        %v754 = vpack.c.b16 %v700, %v698
        %v755 = vpack.c.b16 %v703, %v701
        %v756 = vpack.c.b16 %v704, %v702
        %v757 = vpack.c.b16 %v707, %v705
        %v758 = vpack.c.b16 %v708, %v706
        %v759 = vpack.c.b16 %v711, %v709
        %v760 = vpack.c.b16 %v712, %v710
        %v761 = vpack.c.b16 %v715, %v713
        %v762 = vpack.c.b16 %v716, %v714
        %v763 = vpack.c.b16 %v719, %v717
        %v764 = vpack.c.b16 %v720, %v718
        %v765 = vpack.c.b16 %v723, %v721
        %v766 = vpack.c.b16 %v724, %v722
        %v767 = vpack.c.b16 %v727, %v725
        %v768 = vpack.c.b16 %v728, %v726
        %v769 = vpack.c.b16 %v731, %v729
        %v770 = vpack.c.b16 %v732, %v730
        %v771 = vpack.c.b16 %v735, %v733
        %v772 = vpack.c.b16 %v736, %v734
        %v773 = vpack.c.b16 %v739, %v737
        %v774 = vpack.c.b16 %v740, %v738
        %v775 = vpack.c.b16 %v743, %v741
        %v776 = vpack.c.b16 %v744, %v742
        %v841 = vunpack.c.l.b16 %v617
        %v842 = vunpack.c.l.b16 %v618
        %v843 = vunpack.c.l.b16 %v619
        %v844 = vunpack.c.l.b16 %v620
        %v845 = vunpack.c.l.b16 %v621
        %v846 = vunpack.c.l.b16 %v622
        %v847 = vunpack.c.l.b16 %v623
        %v848 = vunpack.c.l.b16 %v624
        %v849 = vunpack.c.l.b16 %v625
        %v850 = vunpack.c.l.b16 %v626
        %v851 = vunpack.c.l.b16 %v627
        %v852 = vunpack.c.l.b16 %v628
        %v853 = vunpack.c.l.b16 %v629
        %v854 = vunpack.c.l.b16 %v630
        %v855 = vunpack.c.l.b16 %v631
        %v856 = vunpack.c.l.b16 %v632
        %v857 = vunpack.c.l.b16 %v633
        %v858 = vunpack.c.l.b16 %v634
        %v859 = vunpack.c.l.b16 %v635
        %v860 = vunpack.c.l.b16 %v636
        %v861 = vunpack.c.l.b16 %v637
        %v862 = vunpack.c.l.b16 %v638
        %v863 = vunpack.c.l.b16 %v639
        %v864 = vunpack.c.l.b16 %v640
        %v865 = vunpack.c.l.b16 %v641
        %v866 = vunpack.c.l.b16 %v642
        %v867 = vunpack.c.l.b16 %v643
        %v868 = vunpack.c.l.b16 %v644
        %v869 = vunpack.c.l.b16 %v645
        %v870 = vunpack.c.l.b16 %v646
        %v871 = vunpack.c.l.b16 %v647
        %v872 = vunpack.c.l.b16 %v648
        %v873 = vpack.c.b16 %v842, %v841
        %v874 = vpack.c.b16 %v844, %v843
        %v875 = vpack.c.b16 %v846, %v845
        %v876 = vpack.c.b16 %v848, %v847
        %v877 = vpack.c.b16 %v850, %v849
        %v878 = vpack.c.b16 %v852, %v851
        %v879 = vpack.c.b16 %v854, %v853
        %v880 = vpack.c.b16 %v856, %v855
        %v881 = vpack.c.b16 %v858, %v857
        %v882 = vpack.c.b16 %v860, %v859
        %v883 = vpack.c.b16 %v862, %v861
        %v884 = vpack.c.b16 %v864, %v863
        %v885 = vpack.c.b16 %v866, %v865
        %v886 = vpack.c.b16 %v868, %v867
        %v887 = vpack.c.b16 %v870, %v869
        %v888 = vpack.c.b16 %v872, %v871
        %905 = vmatprep.subr.bf16.mxu0 0
        %906 = vmatpush1.bf16.msra.mxu0 %v880
        %907 = vmatprep.subr.bf16.mxu0 0
        %908 = vmatpush1.bf16.msra.mxu0 %v879
        %909 = vmatprep.subr.bf16.mxu0 0
        %910 = vmatpush1.bf16.msra.mxu0 %v878
        %911 = vmatprep.subr.bf16.mxu0 0
        %912 = vmatpush1.bf16.msra.mxu0 %v877
        %913 = vmatprep.subr.bf16.mxu0 0
        %914 = vmatpush1.bf16.msra.mxu0 %v876
        %915 = vmatprep.subr.bf16.mxu0 0
        %916 = vmatpush1.bf16.msra.mxu0 %v875
        %917 = vmatprep.subr.bf16.mxu0 0
        %918 = vmatpush1.bf16.msra.mxu0 %v874
        %919 = vmatprep.subr.bf16.mxu0 0
        %920 = vmatpush1.bf16.msra.mxu0 %v873
        %921 = vmatprep.subr.bf16.mxu0 0
        %922 = vmatpush2.bf16.msra.mxu0 %v888
        %923 = vmatprep.subr.bf16.mxu0 0
        %924 = vmatpush2.bf16.msra.mxu0 %v887
        %925 = vmatprep.subr.bf16.mxu0 0
        %926 = vmatpush2.bf16.msra.mxu0 %v886
        %927 = vmatprep.subr.bf16.mxu0 0
        %928 = vmatpush2.bf16.msra.mxu0 %v885
        %929 = vmatprep.subr.bf16.mxu0 0
        %930 = vmatpush2.bf16.msra.mxu0 %v884
        %931 = vmatprep.subr.bf16.mxu0 0
        %932 = vmatpush2.bf16.msra.mxu0 %v883
        %933 = vmatprep.subr.bf16.mxu0 0
        %934 = vmatpush2.bf16.msra.mxu0 %v882
        %935 = vmatprep.subr.bf16.mxu0 0
        %936 = vmatpush2.bf16.msra.mxu0 %v881
        %937 = vmatprep.mubr.bf16.mxu0 %v746
        %938 = vmatmul.mubr.bf16.gmra.mxu0 %v745
        %v939 = vpop.f32.mrf.mxu0
        %v940 = vadd.f32 0.0, %v939
        %v941 = vpop.f32.mrf.mxu0
        %v942 = vpop.f32.mrf.mxu0
        %v943 = vadd.f32 0.0, %v942
        %v944 = vpop.f32.mrf.mxu0
        %945 = vmatprep.mubr.bf16.mxu0 %v748
        %946 = vmatmul.mubr.bf16.gmra.mxu0 %v747
        %v947 = vpop.f32.mrf.mxu0
        %v948 = vadd.f32 0.0, %v947
        %v949 = vpop.f32.mrf.mxu0
        %v950 = vpop.f32.mrf.mxu0
        %v951 = vadd.f32 0.0, %v950
        %v952 = vpop.f32.mrf.mxu0
        %953 = vmatprep.mubr.bf16.mxu0 %v750
        %954 = vmatmul.mubr.bf16.gmra.mxu0 %v749
        %v955 = vpop.f32.mrf.mxu0
        %v956 = vadd.f32 0.0, %v955
        %v957 = vpop.f32.mrf.mxu0
        %v958 = vpop.f32.mrf.mxu0
        %v959 = vadd.f32 0.0, %v958
        %v960 = vpop.f32.mrf.mxu0
        %961 = vmatprep.mubr.bf16.mxu0 %v752
        %962 = vmatmul.mubr.bf16.gmra.mxu0 %v751
        %v963 = vpop.f32.mrf.mxu0
        %v964 = vadd.f32 0.0, %v963
        %v965 = vpop.f32.mrf.mxu0
        %v966 = vpop.f32.mrf.mxu0
        %v967 = vadd.f32 0.0, %v966
        %v968 = vpop.f32.mrf.mxu0
        %969 = vmatprep.mubr.bf16.mxu0 %v754
        %970 = vmatmul.mubr.bf16.gmra.mxu0 %v753
        %v971 = vpop.f32.mrf.mxu0
        %v972 = vadd.f32 0.0, %v971
        %v973 = vpop.f32.mrf.mxu0
        %v974 = vpop.f32.mrf.mxu0
        %v975 = vadd.f32 0.0, %v974
        %v976 = vpop.f32.mrf.mxu0
        %977 = vmatprep.mubr.bf16.mxu0 %v756
        %978 = vmatmul.mubr.bf16.gmra.mxu0 %v755
        %v979 = vpop.f32.mrf.mxu0
        %v980 = vadd.f32 0.0, %v979
        %v981 = vpop.f32.mrf.mxu0
        %v982 = vpop.f32.mrf.mxu0
        %v983 = vadd.f32 0.0, %v982
        %v984 = vpop.f32.mrf.mxu0
        %985 = vmatprep.mubr.bf16.mxu0 %v758
        %986 = vmatmul.mubr.bf16.gmra.mxu0 %v757
        %v987 = vpop.f32.mrf.mxu0
        %v988 = vadd.f32 0.0, %v987
        %v989 = vpop.f32.mrf.mxu0
        %v990 = vpop.f32.mrf.mxu0
        %v991 = vadd.f32 0.0, %v990
        %v992 = vpop.f32.mrf.mxu0
        %993 = vmatprep.mubr.bf16.mxu0 %v760
        %994 = vmatmul.mubr.bf16.gmra.mxu0 %v759
        %v995 = vpop.f32.mrf.mxu0
        %v996 = vadd.f32 0.0, %v995
        %v997 = vpop.f32.mrf.mxu0
        %v998 = vpop.f32.mrf.mxu0
        %v999 = vadd.f32 0.0, %v998
        %v1000 = vpop.f32.mrf.mxu0
        %1001 = vmatprep.mubr.bf16.mxu0 %v762
        %1002 = vmatmul.mubr.bf16.gmra.mxu0 %v761
        %v1003 = vpop.f32.mrf.mxu0
        %v1004 = vadd.f32 0.0, %v1003
        %v1005 = vpop.f32.mrf.mxu0
        %v1006 = vpop.f32.mrf.mxu0
        %v1007 = vadd.f32 0.0, %v1006
        %v1008 = vpop.f32.mrf.mxu0
        %1009 = vmatprep.mubr.bf16.mxu0 %v764
        %1010 = vmatmul.mubr.bf16.gmra.mxu0 %v763
        %v1011 = vpop.f32.mrf.mxu0
        %v1012 = vadd.f32 0.0, %v1011
        %v1013 = vpop.f32.mrf.mxu0
        %v1014 = vpop.f32.mrf.mxu0
        %v1015 = vadd.f32 0.0, %v1014
        %v1016 = vpop.f32.mrf.mxu0
        %1017 = vmatprep.mubr.bf16.mxu0 %v766
        %1018 = vmatmul.mubr.bf16.gmra.mxu0 %v765
        %v1019 = vpop.f32.mrf.mxu0
        %v1020 = vadd.f32 0.0, %v1019
        %v1021 = vpop.f32.mrf.mxu0
        %v1022 = vpop.f32.mrf.mxu0
        %v1023 = vadd.f32 0.0, %v1022
        %v1024 = vpop.f32.mrf.mxu0
        %1025 = vmatprep.mubr.bf16.mxu0 %v768
        %1026 = vmatmul.mubr.bf16.gmra.mxu0 %v767
        %v1027 = vpop.f32.mrf.mxu0
        %v1028 = vadd.f32 0.0, %v1027
        %v1029 = vpop.f32.mrf.mxu0
        %v1030 = vpop.f32.mrf.mxu0
        %v1031 = vadd.f32 0.0, %v1030
        %v1032 = vpop.f32.mrf.mxu0
        %1033 = vmatprep.mubr.bf16.mxu0 %v770
        %1034 = vmatmul.mubr.bf16.gmra.mxu0 %v769
        %v1035 = vpop.f32.mrf.mxu0
        %v1036 = vadd.f32 0.0, %v1035
        %v1037 = vpop.f32.mrf.mxu0
        %v1038 = vpop.f32.mrf.mxu0
        %v1039 = vadd.f32 0.0, %v1038
        %v1040 = vpop.f32.mrf.mxu0
        %1041 = vmatprep.mubr.bf16.mxu0 %v772
        %1042 = vmatmul.mubr.bf16.gmra.mxu0 %v771
        %v1043 = vpop.f32.mrf.mxu0
        %v1044 = vadd.f32 0.0, %v1043
        %v1045 = vpop.f32.mrf.mxu0
        %v1046 = vpop.f32.mrf.mxu0
        %v1047 = vadd.f32 0.0, %v1046
        %v1048 = vpop.f32.mrf.mxu0
        %1049 = vmatprep.mubr.bf16.mxu0 %v774
        %1050 = vmatmul.mubr.bf16.gmra.mxu0 %v773
        %v1051 = vpop.f32.mrf.mxu0
        %v1052 = vadd.f32 0.0, %v1051
        %v1053 = vpop.f32.mrf.mxu0
        %v1054 = vpop.f32.mrf.mxu0
        %v1055 = vadd.f32 0.0, %v1054
        %v1056 = vpop.f32.mrf.mxu0
        %1057 = vmatprep.mubr.bf16.mxu0 %v776
        %1058 = vmatmul.mubr.bf16.gmra.mxu0 %v775
        %v1059 = vpop.f32.mrf.mxu0
        %v1060 = vadd.f32 0.0, %v1059
        %v1061 = vpop.f32.mrf.mxu0
        %v1062 = vpop.f32.mrf.mxu0
        %v1063 = vadd.f32 0.0, %v1062
        %v1064 = vpop.f32.mrf.mxu0
        %1065 = vdwg.mxu0
        %v1066 = vpack.c.bf16 %v943, %v940
        %v1067 = vpack.c.bf16 %v951, %v948
        %v1068 = vpack.c.bf16 %v959, %v956
        %v1069 = vpack.c.bf16 %v967, %v964
        %v1070 = vpack.c.bf16 %v975, %v972
        %v1071 = vpack.c.bf16 %v983, %v980
        %v1072 = vpack.c.bf16 %v991, %v988
        %v1073 = vpack.c.bf16 %v999, %v996
        %v1074 = vpack.c.bf16 %v1007, %v1004
        %v1075 = vpack.c.bf16 %v1015, %v1012
        %v1076 = vpack.c.bf16 %v1023, %v1020
        %v1077 = vpack.c.bf16 %v1031, %v1028
        %v1078 = vpack.c.bf16 %v1039, %v1036
        %v1079 = vpack.c.bf16 %v1047, %v1044
        %v1080 = vpack.c.bf16 %v1055, %v1052
        %v1081 = vpack.c.bf16 %v1063, %v1060
        %v1082 = vlaneseq
        %v1083 = vshrl.u32 %v1082, 7
        %v1084 = vsub.s32 0, %v1083
        %v1085 = vrot.slane %v372, %v1084
        %vm1086 = vcmask 64512
        %v1088 = vsel %vm1086, %v1066, 0
        %v1091 = vsel %vm1086, %v1067, 0
        %v1094 = vsel %vm1086, %v1068, 0
        %v1097 = vsel %vm1086, %v1069, 0
        %v1100 = vsel %vm1086, %v1070, 0
        %v1103 = vsel %vm1086, %v1071, 0
        %v1106 = vsel %vm1086, %v1072, 0
        %v1109 = vsel %vm1086, %v1073, 0
        %v1112 = vsel %vm1086, %v1074, 0
        %v1115 = vsel %vm1086, %v1075, 0
        %v1118 = vsel %vm1086, %v1076, 0
        %v1121 = vsel %vm1086, %v1077, 0
        %v1124 = vsel %vm1086, %v1078, 0
        %v1127 = vsel %vm1086, %v1079, 0
        %v1130 = vsel %vm1086, %v1080, 0
        %v1133 = vsel %vm1086, %v1081, 0
        %vm1135 = vcmask 1043456
        %v1137 = vsel %vm1135, %v358, 0
        %1139 = vmatprep.subr.bf16.mxu0 0
        %1140 = vmatpush1.bf16.msra.mxu0 0
        %1141 = vmatprep.subr.bf16.mxu0 0
        %1142 = vmatpush1.bf16.msra.mxu0 0
        %1143 = vmatprep.subr.bf16.mxu0 0
        %1144 = vmatpush1.bf16.msra.mxu0 0
        %1145 = vmatprep.subr.bf16.mxu0 0
        %1146 = vmatpush1.bf16.msra.mxu0 0
        %1147 = vmatprep.subr.bf16.mxu0 0
        %1148 = vmatpush1.bf16.msra.mxu0 0
        %1149 = vmatprep.subr.bf16.mxu0 0
        %1150 = vmatpush1.bf16.msra.mxu0 0
        %1151 = vmatprep.subr.bf16.mxu0 0
        %1152 = vmatpush1.bf16.msra.mxu0 0
        %1153 = vmatprep.subr.bf16.mxu0 0
        %1154 = vmatpush1.bf16.msra.mxu0 %v1137
        %1155 = vmatprep.subr.bf16.mxu0 0
        %1156 = vmatpush2.bf16.msra.mxu0 0
        %1157 = vmatprep.subr.bf16.mxu0 0
        %1158 = vmatpush2.bf16.msra.mxu0 0
        %1159 = vmatprep.subr.bf16.mxu0 0
        %1160 = vmatpush2.bf16.msra.mxu0 0
        %1161 = vmatprep.subr.bf16.mxu0 0
        %1162 = vmatpush2.bf16.msra.mxu0 0
        %1163 = vmatprep.subr.bf16.mxu0 0
        %1164 = vmatpush2.bf16.msra.mxu0 0
        %1165 = vmatprep.subr.bf16.mxu0 0
        %1166 = vmatpush2.bf16.msra.mxu0 0
        %1167 = vmatprep.subr.bf16.mxu0 0
        %1168 = vmatpush2.bf16.msra.mxu0 0
        %1169 = vmatprep.subr.bf16.mxu0 0
        %1170 = vmatpush2.bf16.msra.mxu0 0
        %1171 = vmatprep.mubr.bf16.mxu0 0
        %1172 = vmatmul.mubr.bf16.gmra.mxu0 %v1088
        %v1173 = vpop.f32.mrf.mxu0
        %v1174 = vadd.f32 %v1085, %v1173
        %v1175 = vpop.f32.mrf.mxu0
        %v1176 = vpop.f32.mrf.mxu0
        %v1177 = vadd.f32 %v1085, %v1176
        %v1178 = vpop.f32.mrf.mxu0
        %1179 = vmatprep.mubr.bf16.mxu0 0
        %1180 = vmatmul.mubr.bf16.gmra.mxu0 %v1091
        %v1181 = vpop.f32.mrf.mxu0
        %v1182 = vadd.f32 %v1085, %v1181
        %v1183 = vpop.f32.mrf.mxu0
        %v1184 = vpop.f32.mrf.mxu0
        %v1185 = vadd.f32 %v1085, %v1184
        %v1186 = vpop.f32.mrf.mxu0
        %1187 = vmatprep.mubr.bf16.mxu0 0
        %1188 = vmatmul.mubr.bf16.gmra.mxu0 %v1094
        %v1189 = vpop.f32.mrf.mxu0
        %v1190 = vadd.f32 %v1085, %v1189
        %v1191 = vpop.f32.mrf.mxu0
        %v1192 = vpop.f32.mrf.mxu0
        %v1193 = vadd.f32 %v1085, %v1192
        %v1194 = vpop.f32.mrf.mxu0
        %1195 = vmatprep.mubr.bf16.mxu0 0
        %1196 = vmatmul.mubr.bf16.gmra.mxu0 %v1097
        %v1197 = vpop.f32.mrf.mxu0
        %v1198 = vadd.f32 %v1085, %v1197
        %v1199 = vpop.f32.mrf.mxu0
        %v1200 = vpop.f32.mrf.mxu0
        %v1201 = vadd.f32 %v1085, %v1200
        %v1202 = vpop.f32.mrf.mxu0
        %1203 = vmatprep.mubr.bf16.mxu0 0
        %1204 = vmatmul.mubr.bf16.gmra.mxu0 %v1100
        %v1205 = vpop.f32.mrf.mxu0
        %v1206 = vadd.f32 %v1085, %v1205
        %v1207 = vpop.f32.mrf.mxu0
        %v1208 = vpop.f32.mrf.mxu0
        %v1209 = vadd.f32 %v1085, %v1208
        %v1210 = vpop.f32.mrf.mxu0
        %1211 = vmatprep.mubr.bf16.mxu0 0
        %1212 = vmatmul.mubr.bf16.gmra.mxu0 %v1103
        %v1213 = vpop.f32.mrf.mxu0
        %v1214 = vadd.f32 %v1085, %v1213
        %v1215 = vpop.f32.mrf.mxu0
        %v1216 = vpop.f32.mrf.mxu0
        %v1217 = vadd.f32 %v1085, %v1216
        %v1218 = vpop.f32.mrf.mxu0
        %1219 = vmatprep.mubr.bf16.mxu0 0
        %1220 = vmatmul.mubr.bf16.gmra.mxu0 %v1106
        %v1221 = vpop.f32.mrf.mxu0
        %v1222 = vadd.f32 %v1085, %v1221
        %v1223 = vpop.f32.mrf.mxu0
        %v1224 = vpop.f32.mrf.mxu0
        %v1225 = vadd.f32 %v1085, %v1224
        %v1226 = vpop.f32.mrf.mxu0
        %1227 = vmatprep.mubr.bf16.mxu0 0
        %1228 = vmatmul.mubr.bf16.gmra.mxu0 %v1109
        %v1229 = vpop.f32.mrf.mxu0
        %v1230 = vadd.f32 %v1085, %v1229
        %v1231 = vpop.f32.mrf.mxu0
        %v1232 = vpop.f32.mrf.mxu0
        %v1233 = vadd.f32 %v1085, %v1232
        %v1234 = vpop.f32.mrf.mxu0
        %1235 = vmatprep.mubr.bf16.mxu0 0
        %1236 = vmatmul.mubr.bf16.gmra.mxu0 %v1112
        %v1237 = vpop.f32.mrf.mxu0
        %v1238 = vadd.f32 %v1085, %v1237
        %v1239 = vpop.f32.mrf.mxu0
        %v1240 = vpop.f32.mrf.mxu0
        %v1241 = vadd.f32 %v1085, %v1240
        %v1242 = vpop.f32.mrf.mxu0
        %1243 = vmatprep.mubr.bf16.mxu0 0
        %1244 = vmatmul.mubr.bf16.gmra.mxu0 %v1115
        %v1245 = vpop.f32.mrf.mxu0
        %v1246 = vadd.f32 %v1085, %v1245
        %v1247 = vpop.f32.mrf.mxu0
        %v1248 = vpop.f32.mrf.mxu0
        %v1249 = vadd.f32 %v1085, %v1248
        %v1250 = vpop.f32.mrf.mxu0
        %1251 = vmatprep.mubr.bf16.mxu0 0
        %1252 = vmatmul.mubr.bf16.gmra.mxu0 %v1118
        %v1253 = vpop.f32.mrf.mxu0
        %v1254 = vadd.f32 %v1085, %v1253
        %v1255 = vpop.f32.mrf.mxu0
        %v1256 = vpop.f32.mrf.mxu0
        %v1257 = vadd.f32 %v1085, %v1256
        %v1258 = vpop.f32.mrf.mxu0
        %1259 = vmatprep.mubr.bf16.mxu0 0
        %1260 = vmatmul.mubr.bf16.gmra.mxu0 %v1121
        %v1261 = vpop.f32.mrf.mxu0
        %v1262 = vadd.f32 %v1085, %v1261
        %v1263 = vpop.f32.mrf.mxu0
        %v1264 = vpop.f32.mrf.mxu0
        %v1265 = vadd.f32 %v1085, %v1264
        %v1266 = vpop.f32.mrf.mxu0
        %1267 = vmatprep.mubr.bf16.mxu0 0
        %1268 = vmatmul.mubr.bf16.gmra.mxu0 %v1124
        %v1269 = vpop.f32.mrf.mxu0
        %v1270 = vadd.f32 %v1085, %v1269
        %v1271 = vpop.f32.mrf.mxu0
        %v1272 = vpop.f32.mrf.mxu0
        %v1273 = vadd.f32 %v1085, %v1272
        %v1274 = vpop.f32.mrf.mxu0
        %1275 = vmatprep.mubr.bf16.mxu0 0
        %1276 = vmatmul.mubr.bf16.gmra.mxu0 %v1127
        %v1277 = vpop.f32.mrf.mxu0
        %v1278 = vadd.f32 %v1085, %v1277
        %v1279 = vpop.f32.mrf.mxu0
        %v1280 = vpop.f32.mrf.mxu0
        %v1281 = vadd.f32 %v1085, %v1280
        %v1282 = vpop.f32.mrf.mxu0
        %1283 = vmatprep.mubr.bf16.mxu0 0
        %1284 = vmatmul.mubr.bf16.gmra.mxu0 %v1130
        %v1285 = vpop.f32.mrf.mxu0
        %v1286 = vadd.f32 %v1085, %v1285
        %v1287 = vpop.f32.mrf.mxu0
        %v1288 = vpop.f32.mrf.mxu0
        %v1289 = vadd.f32 %v1085, %v1288
        %v1290 = vpop.f32.mrf.mxu0
        %1291 = vmatprep.mubr.bf16.mxu0 0
        %1292 = vmatmul.mubr.bf16.gmra.mxu0 %v1133
        %v1293 = vpop.f32.mrf.mxu0
        %v1294 = vadd.f32 %v1085, %v1293
        %v1295 = vpop.f32.mrf.mxu0
        %v1296 = vpop.f32.mrf.mxu0
        %v1297 = vadd.f32 %v1085, %v1296
        %v1298 = vpop.f32.mrf.mxu0
        %1299 = vdwg.mxu0
        %v1300 = vmax.f32 %v1174, 0.0
        %v1301 = vmax.f32 %v1177, 0.0
        %v1302 = vmax.f32 %v1182, 0.0
        %v1303 = vmax.f32 %v1185, 0.0
        %v1304 = vmax.f32 %v1190, 0.0
        %v1305 = vmax.f32 %v1193, 0.0
        %v1306 = vmax.f32 %v1198, 0.0
        %v1307 = vmax.f32 %v1201, 0.0
        %v1308 = vmax.f32 %v1206, 0.0
        %v1309 = vmax.f32 %v1209, 0.0
        %v1310 = vmax.f32 %v1214, 0.0
        %v1311 = vmax.f32 %v1217, 0.0
        %v1312 = vmax.f32 %v1222, 0.0
        %v1313 = vmax.f32 %v1225, 0.0
        %v1314 = vmax.f32 %v1230, 0.0
        %v1315 = vmax.f32 %v1233, 0.0
        %v1316 = vmax.f32 %v1238, 0.0
        %v1317 = vmax.f32 %v1241, 0.0
        %v1318 = vmax.f32 %v1246, 0.0
        %v1319 = vmax.f32 %v1249, 0.0
        %v1320 = vmax.f32 %v1254, 0.0
        %v1321 = vmax.f32 %v1257, 0.0
        %v1322 = vmax.f32 %v1262, 0.0
        %v1323 = vmax.f32 %v1265, 0.0
        %v1324 = vmax.f32 %v1270, 0.0
        %v1325 = vmax.f32 %v1273, 0.0
        %v1326 = vmax.f32 %v1278, 0.0
        %v1327 = vmax.f32 %v1281, 0.0
        %v1328 = vmax.f32 %v1286, 0.0
        %v1329 = vmax.f32 %v1289, 0.0
        %v1330 = vmax.f32 %v1294, 0.0
        %v1331 = vmax.f32 %v1297, 0.0
        %v1332 = vpack.c.bf16 %v1301, %v1300
        %v1333 = vpack.c.bf16 %v1303, %v1302
        %v1334 = vpack.c.bf16 %v1305, %v1304
        %v1335 = vpack.c.bf16 %v1307, %v1306
        %v1336 = vpack.c.bf16 %v1309, %v1308
        %v1337 = vpack.c.bf16 %v1311, %v1310
        %v1338 = vpack.c.bf16 %v1313, %v1312
        %v1339 = vpack.c.bf16 %v1315, %v1314
        %v1340 = vpack.c.bf16 %v1317, %v1316
        %v1341 = vpack.c.bf16 %v1319, %v1318
        %v1342 = vpack.c.bf16 %v1321, %v1320
        %v1343 = vpack.c.bf16 %v1323, %v1322
        %v1344 = vpack.c.bf16 %v1325, %v1324
        %v1345 = vpack.c.bf16 %v1327, %v1326
        %v1346 = vpack.c.bf16 %v1329, %v1328
        %v1347 = vpack.c.bf16 %v1331, %v1330
        %1348 = vmatprep.subr.bf16.mxu0 0
        %1349 = vmatpush1.bf16.msra.mxu0 %v1339
        %1350 = vmatprep.subr.bf16.mxu0 0
        %1351 = vmatpush1.bf16.msra.mxu0 %v1338
        %1352 = vmatprep.subr.bf16.mxu0 0
        %1353 = vmatpush1.bf16.msra.mxu0 %v1337
        %1354 = vmatprep.subr.bf16.mxu0 0
        %1355 = vmatpush1.bf16.msra.mxu0 %v1336
        %1356 = vmatprep.subr.bf16.mxu0 0
        %1357 = vmatpush1.bf16.msra.mxu0 %v1335
        %1358 = vmatprep.subr.bf16.mxu0 0
        %1359 = vmatpush1.bf16.msra.mxu0 %v1334
        %1360 = vmatprep.subr.bf16.mxu0 0
        %1361 = vmatpush1.bf16.msra.mxu0 %v1333
        %1362 = vmatprep.subr.bf16.mxu0 0
        %1363 = vmatpush1.bf16.msra.mxu0 %v1332
        %1364 = vmatprep.subr.bf16.mxu0 0
        %1365 = vmatpush2.bf16.msra.mxu0 %v1347
        %1366 = vmatprep.subr.bf16.mxu0 0
        %1367 = vmatpush2.bf16.msra.mxu0 %v1346
        %1368 = vmatprep.subr.bf16.mxu0 0
        %1369 = vmatpush2.bf16.msra.mxu0 %v1345
        %1370 = vmatprep.subr.bf16.mxu0 0
        %1371 = vmatpush2.bf16.msra.mxu0 %v1344
        %1372 = vmatprep.subr.bf16.mxu0 0
        %1373 = vmatpush2.bf16.msra.mxu0 %v1343
        %1374 = vmatprep.subr.bf16.mxu0 0
        %1375 = vmatpush2.bf16.msra.mxu0 %v1342
        %1376 = vmatprep.subr.bf16.mxu0 0
        %1377 = vmatpush2.bf16.msra.mxu0 %v1341
        %1378 = vmatprep.subr.bf16.mxu0 0
        %1379 = vmatpush2.bf16.msra.mxu0 %v1340
        %1380 = vmatprep.mubr.bf16.mxu0 %v746
        %1381 = vmatmul.mubr.bf16.gmra.mxu0 %v745
        %v1382 = vpop.f32.mrf.mxu0
        %v1383 = vadd.f32 0.0, %v1382
        %v1384 = vpop.f32.mrf.mxu0
        %v1385 = vpop.f32.mrf.mxu0
        %v1386 = vadd.f32 0.0, %v1385
        %v1387 = vpop.f32.mrf.mxu0
        %1388 = vmatprep.mubr.bf16.mxu0 %v748
        %1389 = vmatmul.mubr.bf16.gmra.mxu0 %v747
        %v1390 = vpop.f32.mrf.mxu0
        %v1391 = vadd.f32 0.0, %v1390
        %v1392 = vpop.f32.mrf.mxu0
        %v1393 = vpop.f32.mrf.mxu0
        %v1394 = vadd.f32 0.0, %v1393
        %v1395 = vpop.f32.mrf.mxu0
        %1396 = vmatprep.mubr.bf16.mxu0 %v750
        %1397 = vmatmul.mubr.bf16.gmra.mxu0 %v749
        %v1398 = vpop.f32.mrf.mxu0
        %v1399 = vadd.f32 0.0, %v1398
        %v1400 = vpop.f32.mrf.mxu0
        %v1401 = vpop.f32.mrf.mxu0
        %v1402 = vadd.f32 0.0, %v1401
        %v1403 = vpop.f32.mrf.mxu0
        %1404 = vmatprep.mubr.bf16.mxu0 %v752
        %1405 = vmatmul.mubr.bf16.gmra.mxu0 %v751
        %v1406 = vpop.f32.mrf.mxu0
        %v1407 = vadd.f32 0.0, %v1406
        %v1408 = vpop.f32.mrf.mxu0
        %v1409 = vpop.f32.mrf.mxu0
        %v1410 = vadd.f32 0.0, %v1409
        %v1411 = vpop.f32.mrf.mxu0
        %1412 = vmatprep.mubr.bf16.mxu0 %v754
        %1413 = vmatmul.mubr.bf16.gmra.mxu0 %v753
        %v1414 = vpop.f32.mrf.mxu0
        %v1415 = vadd.f32 0.0, %v1414
        %v1416 = vpop.f32.mrf.mxu0
        %v1417 = vpop.f32.mrf.mxu0
        %v1418 = vadd.f32 0.0, %v1417
        %v1419 = vpop.f32.mrf.mxu0
        %1420 = vmatprep.mubr.bf16.mxu0 %v756
        %1421 = vmatmul.mubr.bf16.gmra.mxu0 %v755
        %v1422 = vpop.f32.mrf.mxu0
        %v1423 = vadd.f32 0.0, %v1422
        %v1424 = vpop.f32.mrf.mxu0
        %v1425 = vpop.f32.mrf.mxu0
        %v1426 = vadd.f32 0.0, %v1425
        %v1427 = vpop.f32.mrf.mxu0
        %1428 = vmatprep.mubr.bf16.mxu0 %v758
        %1429 = vmatmul.mubr.bf16.gmra.mxu0 %v757
        %v1430 = vpop.f32.mrf.mxu0
        %v1431 = vadd.f32 0.0, %v1430
        %v1432 = vpop.f32.mrf.mxu0
        %v1433 = vpop.f32.mrf.mxu0
        %v1434 = vadd.f32 0.0, %v1433
        %v1435 = vpop.f32.mrf.mxu0
        %1436 = vmatprep.mubr.bf16.mxu0 %v760
        %1437 = vmatmul.mubr.bf16.gmra.mxu0 %v759
        %v1438 = vpop.f32.mrf.mxu0
        %v1439 = vadd.f32 0.0, %v1438
        %v1440 = vpop.f32.mrf.mxu0
        %v1441 = vpop.f32.mrf.mxu0
        %v1442 = vadd.f32 0.0, %v1441
        %v1443 = vpop.f32.mrf.mxu0
        %1444 = vmatprep.mubr.bf16.mxu0 %v762
        %1445 = vmatmul.mubr.bf16.gmra.mxu0 %v761
        %v1446 = vpop.f32.mrf.mxu0
        %v1447 = vadd.f32 0.0, %v1446
        %v1448 = vpop.f32.mrf.mxu0
        %v1449 = vpop.f32.mrf.mxu0
        %v1450 = vadd.f32 0.0, %v1449
        %v1451 = vpop.f32.mrf.mxu0
        %1452 = vmatprep.mubr.bf16.mxu0 %v764
        %1453 = vmatmul.mubr.bf16.gmra.mxu0 %v763
        %v1454 = vpop.f32.mrf.mxu0
        %v1455 = vadd.f32 0.0, %v1454
        %v1456 = vpop.f32.mrf.mxu0
        %v1457 = vpop.f32.mrf.mxu0
        %v1458 = vadd.f32 0.0, %v1457
        %v1459 = vpop.f32.mrf.mxu0
        %1460 = vmatprep.mubr.bf16.mxu0 %v766
        %1461 = vmatmul.mubr.bf16.gmra.mxu0 %v765
        %v1462 = vpop.f32.mrf.mxu0
        %v1463 = vadd.f32 0.0, %v1462
        %v1464 = vpop.f32.mrf.mxu0
        %v1465 = vpop.f32.mrf.mxu0
        %v1466 = vadd.f32 0.0, %v1465
        %v1467 = vpop.f32.mrf.mxu0
        %1468 = vmatprep.mubr.bf16.mxu0 %v768
        %1469 = vmatmul.mubr.bf16.gmra.mxu0 %v767
        %v1470 = vpop.f32.mrf.mxu0
        %v1471 = vadd.f32 0.0, %v1470
        %v1472 = vpop.f32.mrf.mxu0
        %v1473 = vpop.f32.mrf.mxu0
        %v1474 = vadd.f32 0.0, %v1473
        %v1475 = vpop.f32.mrf.mxu0
        %1476 = vmatprep.mubr.bf16.mxu0 %v770
        %1477 = vmatmul.mubr.bf16.gmra.mxu0 %v769
        %v1478 = vpop.f32.mrf.mxu0
        %v1479 = vadd.f32 0.0, %v1478
        %v1480 = vpop.f32.mrf.mxu0
        %v1481 = vpop.f32.mrf.mxu0
        %v1482 = vadd.f32 0.0, %v1481
        %v1483 = vpop.f32.mrf.mxu0
        %1484 = vmatprep.mubr.bf16.mxu0 %v772
        %1485 = vmatmul.mubr.bf16.gmra.mxu0 %v771
        %v1486 = vpop.f32.mrf.mxu0
        %v1487 = vadd.f32 0.0, %v1486
        %v1488 = vpop.f32.mrf.mxu0
        %v1489 = vpop.f32.mrf.mxu0
        %v1490 = vadd.f32 0.0, %v1489
        %v1491 = vpop.f32.mrf.mxu0
        %1492 = vmatprep.mubr.bf16.mxu0 %v774
        %1493 = vmatmul.mubr.bf16.gmra.mxu0 %v773
        %v1494 = vpop.f32.mrf.mxu0
        %v1495 = vadd.f32 0.0, %v1494
        %v1496 = vpop.f32.mrf.mxu0
        %v1497 = vpop.f32.mrf.mxu0
        %v1498 = vadd.f32 0.0, %v1497
        %v1499 = vpop.f32.mrf.mxu0
        %1500 = vmatprep.mubr.bf16.mxu0 %v776
        %1501 = vmatmul.mubr.bf16.gmra.mxu0 %v775
        %v1502 = vpop.f32.mrf.mxu0
        %v1503 = vadd.f32 0.0, %v1502
        %v1504 = vpop.f32.mrf.mxu0
        %v1505 = vpop.f32.mrf.mxu0
        %v1506 = vadd.f32 0.0, %v1505
        %v1507 = vpop.f32.mrf.mxu0
        %1508 = vdwg.mxu0
        %v1509 = vpack.c.bf16 %v1386, %v1383
        %v1510 = vpack.c.bf16 %v1394, %v1391
        %v1511 = vpack.c.bf16 %v1402, %v1399
        %v1512 = vpack.c.bf16 %v1410, %v1407
        %v1513 = vpack.c.bf16 %v1418, %v1415
        %v1514 = vpack.c.bf16 %v1426, %v1423
        %v1515 = vpack.c.bf16 %v1434, %v1431
        %v1516 = vpack.c.bf16 %v1442, %v1439
        %v1517 = vpack.c.bf16 %v1450, %v1447
        %v1518 = vpack.c.bf16 %v1458, %v1455
        %v1519 = vpack.c.bf16 %v1466, %v1463
        %v1520 = vpack.c.bf16 %v1474, %v1471
        %v1521 = vpack.c.bf16 %v1482, %v1479
        %v1522 = vpack.c.bf16 %v1490, %v1487
        %v1523 = vpack.c.bf16 %v1498, %v1495
        %v1524 = vpack.c.bf16 %v1506, %v1503
        %v1525 = vlaneseq
        %v1526 = vshrl.u32 %v1525, 7
        %v1527 = vsub.s32 0, %v1526
        %v1528 = vrot.slane %v373, %v1527
        %v1533 = vunpack.c.l.b16 %v359
        %v1534 = vunpack.c.l.b16 %v360
        %v1535 = vunpack.c.l.b16 %v361
        %v1536 = vunpack.c.l.b16 %v362
        %v1537 = vpack.c.b16 %v1534, %v1533
        %v1538 = vpack.c.b16 %v1536, %v1535
        %vm1541 = vcmask 261120
        %v1543 = vsel %vm1541, %v1509, 0
        %v1546 = vsel %vm1541, %v1510, 0
        %v1549 = vsel %vm1541, %v1511, 0
        %v1552 = vsel %vm1541, %v1512, 0
        %v1555 = vsel %vm1541, %v1513, 0
        %v1558 = vsel %vm1541, %v1514, 0
        %v1561 = vsel %vm1541, %v1515, 0
        %v1564 = vsel %vm1541, %v1516, 0
        %v1567 = vsel %vm1541, %v1517, 0
        %v1570 = vsel %vm1541, %v1518, 0
        %v1573 = vsel %vm1541, %v1519, 0
        %v1576 = vsel %vm1541, %v1520, 0
        %v1579 = vsel %vm1541, %v1521, 0
        %v1582 = vsel %vm1541, %v1522, 0
        %v1585 = vsel %vm1541, %v1523, 0
        %v1588 = vsel %vm1541, %v1524, 0
        %1590 = vmatprep.subr.bf16.mxu0 0
        %1591 = vmatpush1.bf16.msra.mxu0 0
        %1592 = vmatprep.subr.bf16.mxu0 0
        %1593 = vmatpush1.bf16.msra.mxu0 0
        %1594 = vmatprep.subr.bf16.mxu0 0
        %1595 = vmatpush1.bf16.msra.mxu0 0
        %1596 = vmatprep.subr.bf16.mxu0 0
        %1597 = vmatpush1.bf16.msra.mxu0 0
        %1598 = vmatprep.subr.bf16.mxu0 0
        %1599 = vmatpush1.bf16.msra.mxu0 0
        %1600 = vmatprep.subr.bf16.mxu0 0
        %1601 = vmatpush1.bf16.msra.mxu0 0
        %1602 = vmatprep.subr.bf16.mxu0 0
        %1603 = vmatpush1.bf16.msra.mxu0 %v1538
        %1604 = vmatprep.subr.bf16.mxu0 0
        %1605 = vmatpush1.bf16.msra.mxu0 %v1537
        %1606 = vmatprep.subr.bf16.mxu0 0
        %1607 = vmatpush2.bf16.msra.mxu0 0
        %1608 = vmatprep.subr.bf16.mxu0 0
        %1609 = vmatpush2.bf16.msra.mxu0 0
        %1610 = vmatprep.subr.bf16.mxu0 0
        %1611 = vmatpush2.bf16.msra.mxu0 0
        %1612 = vmatprep.subr.bf16.mxu0 0
        %1613 = vmatpush2.bf16.msra.mxu0 0
        %1614 = vmatprep.subr.bf16.mxu0 0
        %1615 = vmatpush2.bf16.msra.mxu0 0
        %1616 = vmatprep.subr.bf16.mxu0 0
        %1617 = vmatpush2.bf16.msra.mxu0 0
        %1618 = vmatprep.subr.bf16.mxu0 0
        %1619 = vmatpush2.bf16.msra.mxu0 0
        %1620 = vmatprep.subr.bf16.mxu0 0
        %1621 = vmatpush2.bf16.msra.mxu0 0
        %1622 = vmatprep.mubr.bf16.mxu0 0
        %1623 = vmatmul.mubr.bf16.gmra.mxu0 %v1543
        %v1624 = vpop.f32.mrf.mxu0
        %v1625 = vadd.f32 %v1528, %v1624
        %v1626 = vpop.f32.mrf.mxu0
        %v1627 = vpop.f32.mrf.mxu0
        %v1628 = vadd.f32 %v1528, %v1627
        %v1629 = vpop.f32.mrf.mxu0
        %1630 = vmatprep.mubr.bf16.mxu0 0
        %1631 = vmatmul.mubr.bf16.gmra.mxu0 %v1546
        %v1632 = vpop.f32.mrf.mxu0
        %v1633 = vadd.f32 %v1528, %v1632
        %v1634 = vpop.f32.mrf.mxu0
        %v1635 = vpop.f32.mrf.mxu0
        %v1636 = vadd.f32 %v1528, %v1635
        %v1637 = vpop.f32.mrf.mxu0
        %1638 = vmatprep.mubr.bf16.mxu0 0
        %1639 = vmatmul.mubr.bf16.gmra.mxu0 %v1549
        %v1640 = vpop.f32.mrf.mxu0
        %v1641 = vadd.f32 %v1528, %v1640
        %v1642 = vpop.f32.mrf.mxu0
        %v1643 = vpop.f32.mrf.mxu0
        %v1644 = vadd.f32 %v1528, %v1643
        %v1645 = vpop.f32.mrf.mxu0
        %1646 = vmatprep.mubr.bf16.mxu0 0
        %1647 = vmatmul.mubr.bf16.gmra.mxu0 %v1552
        %v1648 = vpop.f32.mrf.mxu0
        %v1649 = vadd.f32 %v1528, %v1648
        %v1650 = vpop.f32.mrf.mxu0
        %v1651 = vpop.f32.mrf.mxu0
        %v1652 = vadd.f32 %v1528, %v1651
        %v1653 = vpop.f32.mrf.mxu0
        %1654 = vmatprep.mubr.bf16.mxu0 0
        %1655 = vmatmul.mubr.bf16.gmra.mxu0 %v1555
        %v1656 = vpop.f32.mrf.mxu0
        %v1657 = vadd.f32 %v1528, %v1656
        %v1658 = vpop.f32.mrf.mxu0
        %v1659 = vpop.f32.mrf.mxu0
        %v1660 = vadd.f32 %v1528, %v1659
        %v1661 = vpop.f32.mrf.mxu0
        %1662 = vmatprep.mubr.bf16.mxu0 0
        %1663 = vmatmul.mubr.bf16.gmra.mxu0 %v1558
        %v1664 = vpop.f32.mrf.mxu0
        %v1665 = vadd.f32 %v1528, %v1664
        %v1666 = vpop.f32.mrf.mxu0
        %v1667 = vpop.f32.mrf.mxu0
        %v1668 = vadd.f32 %v1528, %v1667
        %v1669 = vpop.f32.mrf.mxu0
        %1670 = vmatprep.mubr.bf16.mxu0 0
        %1671 = vmatmul.mubr.bf16.gmra.mxu0 %v1561
        %v1672 = vpop.f32.mrf.mxu0
        %v1673 = vadd.f32 %v1528, %v1672
        %v1674 = vpop.f32.mrf.mxu0
        %v1675 = vpop.f32.mrf.mxu0
        %v1676 = vadd.f32 %v1528, %v1675
        %v1677 = vpop.f32.mrf.mxu0
        %1678 = vmatprep.mubr.bf16.mxu0 0
        %1679 = vmatmul.mubr.bf16.gmra.mxu0 %v1564
        %v1680 = vpop.f32.mrf.mxu0
        %v1681 = vadd.f32 %v1528, %v1680
        %v1682 = vpop.f32.mrf.mxu0
        %v1683 = vpop.f32.mrf.mxu0
        %v1684 = vadd.f32 %v1528, %v1683
        %v1685 = vpop.f32.mrf.mxu0
        %1686 = vmatprep.mubr.bf16.mxu0 0
        %1687 = vmatmul.mubr.bf16.gmra.mxu0 %v1567
        %v1688 = vpop.f32.mrf.mxu0
        %v1689 = vadd.f32 %v1528, %v1688
        %v1690 = vpop.f32.mrf.mxu0
        %v1691 = vpop.f32.mrf.mxu0
        %v1692 = vadd.f32 %v1528, %v1691
        %v1693 = vpop.f32.mrf.mxu0
        %1694 = vmatprep.mubr.bf16.mxu0 0
        %1695 = vmatmul.mubr.bf16.gmra.mxu0 %v1570
        %v1696 = vpop.f32.mrf.mxu0
        %v1697 = vadd.f32 %v1528, %v1696
        %v1698 = vpop.f32.mrf.mxu0
        %v1699 = vpop.f32.mrf.mxu0
        %v1700 = vadd.f32 %v1528, %v1699
        %v1701 = vpop.f32.mrf.mxu0
        %1702 = vmatprep.mubr.bf16.mxu0 0
        %1703 = vmatmul.mubr.bf16.gmra.mxu0 %v1573
        %v1704 = vpop.f32.mrf.mxu0
        %v1705 = vadd.f32 %v1528, %v1704
        %v1706 = vpop.f32.mrf.mxu0
        %v1707 = vpop.f32.mrf.mxu0
        %v1708 = vadd.f32 %v1528, %v1707
        %v1709 = vpop.f32.mrf.mxu0
        %1710 = vmatprep.mubr.bf16.mxu0 0
        %1711 = vmatmul.mubr.bf16.gmra.mxu0 %v1576
        %v1712 = vpop.f32.mrf.mxu0
        %v1713 = vadd.f32 %v1528, %v1712
        %v1714 = vpop.f32.mrf.mxu0
        %v1715 = vpop.f32.mrf.mxu0
        %v1716 = vadd.f32 %v1528, %v1715
        %v1717 = vpop.f32.mrf.mxu0
        %1718 = vmatprep.mubr.bf16.mxu0 0
        %1719 = vmatmul.mubr.bf16.gmra.mxu0 %v1579
        %v1720 = vpop.f32.mrf.mxu0
        %v1721 = vadd.f32 %v1528, %v1720
        %v1722 = vpop.f32.mrf.mxu0
        %v1723 = vpop.f32.mrf.mxu0
        %v1724 = vadd.f32 %v1528, %v1723
        %v1725 = vpop.f32.mrf.mxu0
        %1726 = vmatprep.mubr.bf16.mxu0 0
        %1727 = vmatmul.mubr.bf16.gmra.mxu0 %v1582
        %v1728 = vpop.f32.mrf.mxu0
        %v1729 = vadd.f32 %v1528, %v1728
        %v1730 = vpop.f32.mrf.mxu0
        %v1731 = vpop.f32.mrf.mxu0
        %v1732 = vadd.f32 %v1528, %v1731
        %v1733 = vpop.f32.mrf.mxu0
        %1734 = vmatprep.mubr.bf16.mxu0 0
        %1735 = vmatmul.mubr.bf16.gmra.mxu0 %v1585
        %v1736 = vpop.f32.mrf.mxu0
        %v1737 = vadd.f32 %v1528, %v1736
        %v1738 = vpop.f32.mrf.mxu0
        %v1739 = vpop.f32.mrf.mxu0
        %v1740 = vadd.f32 %v1528, %v1739
        %v1741 = vpop.f32.mrf.mxu0
        %1742 = vmatprep.mubr.bf16.mxu0 0
        %1743 = vmatmul.mubr.bf16.gmra.mxu0 %v1588
        %v1744 = vpop.f32.mrf.mxu0
        %v1745 = vadd.f32 %v1528, %v1744
        %v1746 = vpop.f32.mrf.mxu0
        %v1747 = vpop.f32.mrf.mxu0
        %v1748 = vadd.f32 %v1528, %v1747
        %v1749 = vpop.f32.mrf.mxu0
        %1750 = vdwg.mxu0
        %v1751 = vmax.f32 %v1625, 0.0
        %v1752 = vmax.f32 %v1628, 0.0
        %v1753 = vmax.f32 %v1633, 0.0
        %v1754 = vmax.f32 %v1636, 0.0
        %v1755 = vmax.f32 %v1641, 0.0
        %v1756 = vmax.f32 %v1644, 0.0
        %v1757 = vmax.f32 %v1649, 0.0
        %v1758 = vmax.f32 %v1652, 0.0
        %v1759 = vmax.f32 %v1657, 0.0
        %v1760 = vmax.f32 %v1660, 0.0
        %v1761 = vmax.f32 %v1665, 0.0
        %v1762 = vmax.f32 %v1668, 0.0
        %v1763 = vmax.f32 %v1673, 0.0
        %v1764 = vmax.f32 %v1676, 0.0
        %v1765 = vmax.f32 %v1681, 0.0
        %v1766 = vmax.f32 %v1684, 0.0
        %v1767 = vmax.f32 %v1689, 0.0
        %v1768 = vmax.f32 %v1692, 0.0
        %v1769 = vmax.f32 %v1697, 0.0
        %v1770 = vmax.f32 %v1700, 0.0
        %v1771 = vmax.f32 %v1705, 0.0
        %v1772 = vmax.f32 %v1708, 0.0
        %v1773 = vmax.f32 %v1713, 0.0
        %v1774 = vmax.f32 %v1716, 0.0
        %v1775 = vmax.f32 %v1721, 0.0
        %v1776 = vmax.f32 %v1724, 0.0
        %v1777 = vmax.f32 %v1729, 0.0
        %v1778 = vmax.f32 %v1732, 0.0
        %v1779 = vmax.f32 %v1737, 0.0
        %v1780 = vmax.f32 %v1740, 0.0
        %v1781 = vmax.f32 %v1745, 0.0
        %v1782 = vmax.f32 %v1748, 0.0
        %s1783 = smul.addr %s416, 4
        %s1784 = scalar_lea.vmem %s344, %s1783
        %v1785 = vld [vmem:[%s1784] sm:$0xf]
        %v1786 = vld [vmem:[%s1784 + $0x4] sm:$0xf]
        %v1787 = vld [vmem:[%s1784 + $0x8] sm:$0xf]
        %v1788 = vld [vmem:[%s1784 + $0xc] sm:$0xf]
        %v1789 = vld [vmem:[%s1784 + $0x10] sm:$0xf]
        %v1790 = vld [vmem:[%s1784 + $0x14] sm:$0xf]
        %v1791 = vld [vmem:[%s1784 + $0x18] sm:$0xf]
        %v1792 = vld [vmem:[%s1784 + $0x1c] sm:$0xf]
        %v1793 = vld [vmem:[%s1784 + $0x20] sm:$0xf]
        %v1794 = vld [vmem:[%s1784 + $0x24] sm:$0xf]
        %v1795 = vld [vmem:[%s1784 + $0x28] sm:$0xf]
        %v1796 = vld [vmem:[%s1784 + $0x2c] sm:$0xf]
        %v1797 = vld [vmem:[%s1784 + $0x30] sm:$0xf]
        %v1798 = vld [vmem:[%s1784 + $0x34] sm:$0xf]
        %v1799 = vld [vmem:[%s1784 + $0x38] sm:$0xf]
        %v1800 = vld [vmem:[%s1784 + $0x3c] sm:$0xf]
        %v1801 = vld [vmem:[%s1784 + $0x40] sm:$0xf]
        %v1802 = vld [vmem:[%s1784 + $0x44] sm:$0xf]
        %v1803 = vld [vmem:[%s1784 + $0x48] sm:$0xf]
        %v1804 = vld [vmem:[%s1784 + $0x4c] sm:$0xf]
        %v1805 = vld [vmem:[%s1784 + $0x50] sm:$0xf]
        %v1806 = vld [vmem:[%s1784 + $0x54] sm:$0xf]
        %v1807 = vld [vmem:[%s1784 + $0x58] sm:$0xf]
        %v1808 = vld [vmem:[%s1784 + $0x5c] sm:$0xf]
        %v1809 = vld [vmem:[%s1784 + $0x60] sm:$0xf]
        %v1810 = vld [vmem:[%s1784 + $0x64] sm:$0xf]
        %v1811 = vld [vmem:[%s1784 + $0x68] sm:$0xf]
        %v1812 = vld [vmem:[%s1784 + $0x6c] sm:$0xf]
        %v1813 = vld [vmem:[%s1784 + $0x70] sm:$0xf]
        %v1814 = vld [vmem:[%s1784 + $0x74] sm:$0xf]
        %v1815 = vld [vmem:[%s1784 + $0x78] sm:$0xf]
        %v1816 = vld [vmem:[%s1784 + $0x7c] sm:$0xf]
        %v1817 = vunpack.c.l.bf16 %v1785
        %v1818 = vunpack.c.l.bf16 %v1786
        %v1819 = vunpack.c.l.bf16 %v1787
        %v1820 = vunpack.c.l.bf16 %v1788
        %v1821 = vunpack.c.l.bf16 %v1789
        %v1822 = vunpack.c.l.bf16 %v1790
        %v1823 = vunpack.c.l.bf16 %v1791
        %v1824 = vunpack.c.l.bf16 %v1792
        %v1825 = vunpack.c.l.bf16 %v1793
        %v1826 = vunpack.c.l.bf16 %v1794
        %v1827 = vunpack.c.l.bf16 %v1795
        %v1828 = vunpack.c.l.bf16 %v1796
        %v1829 = vunpack.c.l.bf16 %v1797
        %v1830 = vunpack.c.l.bf16 %v1798
        %v1831 = vunpack.c.l.bf16 %v1799
        %v1832 = vunpack.c.l.bf16 %v1800
        %v1833 = vunpack.c.l.bf16 %v1801
        %v1834 = vunpack.c.l.bf16 %v1802
        %v1835 = vunpack.c.l.bf16 %v1803
        %v1836 = vunpack.c.l.bf16 %v1804
        %v1837 = vunpack.c.l.bf16 %v1805
        %v1838 = vunpack.c.l.bf16 %v1806
        %v1839 = vunpack.c.l.bf16 %v1807
        %v1840 = vunpack.c.l.bf16 %v1808
        %v1841 = vunpack.c.l.bf16 %v1809
        %v1842 = vunpack.c.l.bf16 %v1810
        %v1843 = vunpack.c.l.bf16 %v1811
        %v1844 = vunpack.c.l.bf16 %v1812
        %v1845 = vunpack.c.l.bf16 %v1813
        %v1846 = vunpack.c.l.bf16 %v1814
        %v1847 = vunpack.c.l.bf16 %v1815
        %v1848 = vunpack.c.l.bf16 %v1816
        %1850 = vset.pattern.permute.xlu0 0
        %1851 = vperm.xlu0 %1850, %v1817
        %v1852 = vpop.permute.xlu0 %1851
        %1855 = vset.pattern.permute.xlu0 0
        %1856 = vperm.xlu0 %1855, %v1818
        %v1857 = vpop.permute.xlu0 %1856
        %1860 = vset.pattern.permute.xlu0 0
        %1861 = vperm.xlu0 %1860, %v1819
        %v1862 = vpop.permute.xlu0 %1861
        %1865 = vset.pattern.permute.xlu0 0
        %1866 = vperm.xlu0 %1865, %v1820
        %v1867 = vpop.permute.xlu0 %1866
        %1870 = vset.pattern.permute.xlu0 0
        %1871 = vperm.xlu0 %1870, %v1821
        %v1872 = vpop.permute.xlu0 %1871
        %1875 = vset.pattern.permute.xlu0 0
        %1876 = vperm.xlu0 %1875, %v1822
        %v1877 = vpop.permute.xlu0 %1876
        %1880 = vset.pattern.permute.xlu0 0
        %1881 = vperm.xlu0 %1880, %v1823
        %v1882 = vpop.permute.xlu0 %1881
        %1885 = vset.pattern.permute.xlu0 0
        %1886 = vperm.xlu0 %1885, %v1824
        %v1887 = vpop.permute.xlu0 %1886
        %1890 = vset.pattern.permute.xlu0 0
        %1891 = vperm.xlu0 %1890, %v1825
        %v1892 = vpop.permute.xlu0 %1891
        %1895 = vset.pattern.permute.xlu0 0
        %1896 = vperm.xlu0 %1895, %v1826
        %v1897 = vpop.permute.xlu0 %1896
        %1900 = vset.pattern.permute.xlu0 0
        %1901 = vperm.xlu0 %1900, %v1827
        %v1902 = vpop.permute.xlu0 %1901
        %1905 = vset.pattern.permute.xlu0 0
        %1906 = vperm.xlu0 %1905, %v1828
        %v1907 = vpop.permute.xlu0 %1906
        %1910 = vset.pattern.permute.xlu0 0
        %1911 = vperm.xlu0 %1910, %v1829
        %v1912 = vpop.permute.xlu0 %1911
        %1915 = vset.pattern.permute.xlu0 0
        %1916 = vperm.xlu0 %1915, %v1830
        %v1917 = vpop.permute.xlu0 %1916
        %1920 = vset.pattern.permute.xlu0 0
        %1921 = vperm.xlu0 %1920, %v1831
        %v1922 = vpop.permute.xlu0 %1921
        %1925 = vset.pattern.permute.xlu0 0
        %1926 = vperm.xlu0 %1925, %v1832
        %v1927 = vpop.permute.xlu0 %1926
        %1930 = vset.pattern.permute.xlu0 0
        %1931 = vperm.xlu0 %1930, %v1833
        %v1932 = vpop.permute.xlu0 %1931
        %1935 = vset.pattern.permute.xlu0 0
        %1936 = vperm.xlu0 %1935, %v1834
        %v1937 = vpop.permute.xlu0 %1936
        %1940 = vset.pattern.permute.xlu0 0
        %1941 = vperm.xlu0 %1940, %v1835
        %v1942 = vpop.permute.xlu0 %1941
        %1945 = vset.pattern.permute.xlu0 0
        %1946 = vperm.xlu0 %1945, %v1836
        %v1947 = vpop.permute.xlu0 %1946
        %1950 = vset.pattern.permute.xlu0 0
        %1951 = vperm.xlu0 %1950, %v1837
        %v1952 = vpop.permute.xlu0 %1951
        %1955 = vset.pattern.permute.xlu0 0
        %1956 = vperm.xlu0 %1955, %v1838
        %v1957 = vpop.permute.xlu0 %1956
        %1960 = vset.pattern.permute.xlu0 0
        %1961 = vperm.xlu0 %1960, %v1839
        %v1962 = vpop.permute.xlu0 %1961
        %1965 = vset.pattern.permute.xlu0 0
        %1966 = vperm.xlu0 %1965, %v1840
        %v1967 = vpop.permute.xlu0 %1966
        %1970 = vset.pattern.permute.xlu0 0
        %1971 = vperm.xlu0 %1970, %v1841
        %v1972 = vpop.permute.xlu0 %1971
        %1975 = vset.pattern.permute.xlu0 0
        %1976 = vperm.xlu0 %1975, %v1842
        %v1977 = vpop.permute.xlu0 %1976
        %1980 = vset.pattern.permute.xlu0 0
        %1981 = vperm.xlu0 %1980, %v1843
        %v1982 = vpop.permute.xlu0 %1981
        %1985 = vset.pattern.permute.xlu0 0
        %1986 = vperm.xlu0 %1985, %v1844
        %v1987 = vpop.permute.xlu0 %1986
        %1990 = vset.pattern.permute.xlu0 0
        %1991 = vperm.xlu0 %1990, %v1845
        %v1992 = vpop.permute.xlu0 %1991
        %1995 = vset.pattern.permute.xlu0 0
        %1996 = vperm.xlu0 %1995, %v1846
        %v1997 = vpop.permute.xlu0 %1996
        %2000 = vset.pattern.permute.xlu0 0
        %2001 = vperm.xlu0 %2000, %v1847
        %v2002 = vpop.permute.xlu0 %2001
        %2005 = vset.pattern.permute.xlu0 0
        %2006 = vperm.xlu0 %2005, %v1848
        %v2007 = vpop.permute.xlu0 %2006
        %v2009 = vmul.f32 %v1751, %v1852
        %v2010 = vmul.f32 %v1752, %v1857
        %v2011 = vmul.f32 %v1753, %v1862
        %v2012 = vmul.f32 %v1754, %v1867
        %v2013 = vmul.f32 %v1755, %v1872
        %v2014 = vmul.f32 %v1756, %v1877
        %v2015 = vmul.f32 %v1757, %v1882
        %v2016 = vmul.f32 %v1758, %v1887
        %v2017 = vmul.f32 %v1759, %v1892
        %v2018 = vmul.f32 %v1760, %v1897
        %v2019 = vmul.f32 %v1761, %v1902
        %v2020 = vmul.f32 %v1762, %v1907
        %v2021 = vmul.f32 %v1763, %v1912
        %v2022 = vmul.f32 %v1764, %v1917
        %v2023 = vmul.f32 %v1765, %v1922
        %v2024 = vmul.f32 %v1766, %v1927
        %v2025 = vmul.f32 %v1767, %v1932
        %v2026 = vmul.f32 %v1768, %v1937
        %v2027 = vmul.f32 %v1769, %v1942
        %v2028 = vmul.f32 %v1770, %v1947
        %v2029 = vmul.f32 %v1771, %v1952
        %v2030 = vmul.f32 %v1772, %v1957
        %v2031 = vmul.f32 %v1773, %v1962
        %v2032 = vmul.f32 %v1774, %v1967
        %v2033 = vmul.f32 %v1775, %v1972
        %v2034 = vmul.f32 %v1776, %v1977
        %v2035 = vmul.f32 %v1777, %v1982
        %v2036 = vmul.f32 %v1778, %v1987
        %v2037 = vmul.f32 %v1779, %v1992
        %v2038 = vmul.f32 %v1780, %v1997
        %v2039 = vmul.f32 %v1781, %v2002
        %v2040 = vmul.f32 %v1782, %v2007
        %v2041 = vpack.c.bf16 %v2010, %v2009
        %v2042 = vpack.c.bf16 %v2012, %v2011
        %v2043 = vpack.c.bf16 %v2014, %v2013
        %v2044 = vpack.c.bf16 %v2016, %v2015
        %v2045 = vpack.c.bf16 %v2018, %v2017
        %v2046 = vpack.c.bf16 %v2020, %v2019
        %v2047 = vpack.c.bf16 %v2022, %v2021
        %v2048 = vpack.c.bf16 %v2024, %v2023
        %v2049 = vpack.c.bf16 %v2026, %v2025
        %v2050 = vpack.c.bf16 %v2028, %v2027
        %v2051 = vpack.c.bf16 %v2030, %v2029
        %v2052 = vpack.c.bf16 %v2032, %v2031
        %v2053 = vpack.c.bf16 %v2034, %v2033
        %v2054 = vpack.c.bf16 %v2036, %v2035
        %v2055 = vpack.c.bf16 %v2038, %v2037
        %v2056 = vpack.c.bf16 %v2040, %v2039
        %v2059 = vunpack.c.l.b16 %v376
        %v2060 = vunpack.c.h.b16 %v376
        %v2061 = vunpack.c.l.b16 %v377
        %v2062 = vunpack.c.h.b16 %v377
        %v2063 = vpack.c.b16 %v2061, %v2059
        %v2064 = vpack.c.b16 %v2062, %v2060
        %2067 = vmatprep.subr.bf16.mxu0 0
        %2068 = vmatpush1.bf16.msra.mxu0 %v2048
        %2069 = vmatprep.subr.bf16.mxu0 0
        %2070 = vmatpush1.bf16.msra.mxu0 %v2047
        %2071 = vmatprep.subr.bf16.mxu0 0
        %2072 = vmatpush1.bf16.msra.mxu0 %v2046
        %2073 = vmatprep.subr.bf16.mxu0 0
        %2074 = vmatpush1.bf16.msra.mxu0 %v2045
        %2075 = vmatprep.subr.bf16.mxu0 0
        %2076 = vmatpush1.bf16.msra.mxu0 %v2044
        %2077 = vmatprep.subr.bf16.mxu0 0
        %2078 = vmatpush1.bf16.msra.mxu0 %v2043
        %2079 = vmatprep.subr.bf16.mxu0 0
        %2080 = vmatpush1.bf16.msra.mxu0 %v2042
        %2081 = vmatprep.subr.bf16.mxu0 0
        %2082 = vmatpush1.bf16.msra.mxu0 %v2041
        %2083 = vmatprep.subr.bf16.mxu0 0
        %2084 = vmatpush2.bf16.msra.mxu0 %v2056
        %2085 = vmatprep.subr.bf16.mxu0 0
        %2086 = vmatpush2.bf16.msra.mxu0 %v2055
        %2087 = vmatprep.subr.bf16.mxu0 0
        %2088 = vmatpush2.bf16.msra.mxu0 %v2054
        %2089 = vmatprep.subr.bf16.mxu0 0
        %2090 = vmatpush2.bf16.msra.mxu0 %v2053
        %2091 = vmatprep.subr.bf16.mxu0 0
        %2092 = vmatpush2.bf16.msra.mxu0 %v2052
        %2093 = vmatprep.subr.bf16.mxu0 0
        %2094 = vmatpush2.bf16.msra.mxu0 %v2051
        %2095 = vmatprep.subr.bf16.mxu0 0
        %2096 = vmatpush2.bf16.msra.mxu0 %v2050
        %2097 = vmatprep.subr.bf16.mxu0 0
        %2098 = vmatpush2.bf16.msra.mxu0 %v2049
        %2099 = vmatprep.mubr.bf16.mxu0 %v2064
        %2100 = vmatmul.mubr.bf16.gmra.mxu0 %v2063
        %v2101 = vpop.f32.mrf.mxu0
        %v2102 = vadd.f32 0.0, %v2101
        %v2103 = vpop.f32.mrf.mxu0
        %v2104 = vpop.f32.mrf.mxu0
        %v2105 = vadd.f32 0.0, %v2104
        %v2106 = vpop.f32.mrf.mxu0
        %2107 = vdwg.mxu0
        %s2108 = smul.u32 %s411, 16
        %s2109 = scalar_lea.vmem %s351, %s2108
        %v2110 = vld [vmem:[%s2109] sm:$0xff]
        %v2111 = vld [vmem:[%s2109 + $0x8] sm:$0xff]
        %2113 = vset.pattern.permute.xlu0 0
        %2114 = vperm.xlu0 %2113, %v2110
        %v2115 = vpop.permute.xlu0 %2114
        %2118 = vset.pattern.permute.xlu0 0
        %2119 = vperm.xlu0 %2118, %v2111
        %v2120 = vpop.permute.xlu0 %2119
        %v2122 = vmul.f32 %v2102, %v2115
        %v2123 = vmul.f32 %v2105, %v2120
        %s2124 = smul.u32 %s411, 8
        %s2125 = scalar_lea.vmem [#allocation3], %s2124
        %2126 = vst.msk [vmem:[%s2125] sm:$0xff] %vm1541, %v2122
        %s2127 = scalar_lea.vmem [#allocation4], %s2124
        %2128 = vst.msk [vmem:[%s2127] sm:$0xff] %vm1541, %v2123
      $region53: #{hgmn_forward.1} parent=47 // loop_footer
        %s415 = sadd.s32 1, %s411
      $region54: #{hgmn_forward.1} parent=47 // loop_footer_branch
        %410 = sbr.rel target = $region50
      $region55: #{hgmn_forward.1} parent=47 // loop_exit
        _
      %v2129 = vld [vmem:[#allocation3] sm:$0xff]
      %v2130 = vld [vmem:[#allocation3 + $0x8] sm:$0xff]
      %v2131 = vld [vmem:[#allocation3 + $0x10] sm:$0xff]
      %v2132 = vld [vmem:[#allocation3 + $0x18] sm:$0xff]
      %v2133 = vpack.c.bf16 %v2130, %v2129
      %v2134 = vpack.c.bf16 %v2132, %v2131
      %v2135 = vld [vmem:[#allocation4] sm:$0xff]
      %v2136 = vld [vmem:[#allocation4 + $0x8] sm:$0xff]
      %v2137 = vld [vmem:[#allocation4 + $0x10] sm:$0xff]
      %v2138 = vld [vmem:[#allocation4 + $0x18] sm:$0xff]
      %v2139 = vpack.c.bf16 %v2136, %v2135
      %v2140 = vpack.c.bf16 %v2138, %v2137
      %v2145 = vunpack.c.l.b16 %v367
      %v2146 = vunpack.c.l.b16 %v368
      %v2147 = vunpack.c.l.b16 %v369
      %v2148 = vunpack.c.l.b16 %v370
      %v2149 = vpack.c.b16 %v2146, %v2145
      %v2150 = vpack.c.b16 %v2148, %v2147
      %vm2153 = vcmask 261120
      %v2155 = vsel %vm2153, %v2139, 0
      %v2158 = vsel %vm2153, %v2140, 0
      %2160 = vmatprep.subr.bf16.mxu0 0
      %2161 = vmatpush1.bf16.msra.mxu0 0
      %2162 = vmatprep.subr.bf16.mxu0 0
      %2163 = vmatpush1.bf16.msra.mxu0 0
      %2164 = vmatprep.subr.bf16.mxu0 0
      %2165 = vmatpush1.bf16.msra.mxu0 0
      %2166 = vmatprep.subr.bf16.mxu0 0
      %2167 = vmatpush1.bf16.msra.mxu0 0
      %2168 = vmatprep.subr.bf16.mxu0 0
      %2169 = vmatpush1.bf16.msra.mxu0 0
      %2170 = vmatprep.subr.bf16.mxu0 0
      %2171 = vmatpush1.bf16.msra.mxu0 0
      %2172 = vmatprep.subr.bf16.mxu0 0
      %2173 = vmatpush1.bf16.msra.mxu0 %v2150
      %2174 = vmatprep.subr.bf16.mxu0 0
      %2175 = vmatpush1.bf16.msra.mxu0 %v2149
      %2176 = vmatprep.subr.bf16.mxu0 0
      %2177 = vmatpush2.bf16.msra.mxu0 0
      %2178 = vmatprep.subr.bf16.mxu0 0
      %2179 = vmatpush2.bf16.msra.mxu0 0
      %2180 = vmatprep.subr.bf16.mxu0 0
      %2181 = vmatpush2.bf16.msra.mxu0 0
      %2182 = vmatprep.subr.bf16.mxu0 0
      %2183 = vmatpush2.bf16.msra.mxu0 0
      %2184 = vmatprep.subr.bf16.mxu0 0
      %2185 = vmatpush2.bf16.msra.mxu0 0
      %2186 = vmatprep.subr.bf16.mxu0 0
      %2187 = vmatpush2.bf16.msra.mxu0 0
      %2188 = vmatprep.subr.bf16.mxu0 0
      %2189 = vmatpush2.bf16.msra.mxu0 0
      %2190 = vmatprep.subr.bf16.mxu0 0
      %2191 = vmatpush2.bf16.msra.mxu0 0
      %2192 = vmatprep.mubr.bf16.mxu0 0
      %2193 = vmatmul.mubr.bf16.gmra.mxu0 %v2155
      %v2194 = vpop.f32.mrf.mxu0
      %v2195 = vadd.f32 0.0, %v2194
      %v2196 = vpop.f32.mrf.mxu0
      %v2197 = vpop.f32.mrf.mxu0
      %v2198 = vadd.f32 0.0, %v2197
      %v2199 = vpop.f32.mrf.mxu0
      %2200 = vmatprep.mubr.bf16.mxu0 0
      %2201 = vmatmul.mubr.bf16.gmra.mxu0 %v2158
      %v2202 = vpop.f32.mrf.mxu0
      %v2203 = vadd.f32 0.0, %v2202
      %v2204 = vpop.f32.mrf.mxu0
      %v2205 = vpop.f32.mrf.mxu0
      %v2206 = vadd.f32 0.0, %v2205
      %v2207 = vpop.f32.mrf.mxu0
      %2208 = vdwg.mxu0
      %v2213 = vunpack.c.l.b16 %v363
      %v2214 = vunpack.c.l.b16 %v364
      %v2215 = vunpack.c.l.b16 %v365
      %v2216 = vunpack.c.l.b16 %v366
      %v2217 = vpack.c.b16 %v2214, %v2213
      %v2218 = vpack.c.b16 %v2216, %v2215
      %v2222 = vsel %vm2153, %v2133, 0
      %v2225 = vsel %vm2153, %v2134, 0
      %2227 = vmatprep.subr.bf16.mxu0 0
      %2228 = vmatpush1.bf16.msra.mxu0 0
      %2229 = vmatprep.subr.bf16.mxu0 0
      %2230 = vmatpush1.bf16.msra.mxu0 0
      %2231 = vmatprep.subr.bf16.mxu0 0
      %2232 = vmatpush1.bf16.msra.mxu0 0
      %2233 = vmatprep.subr.bf16.mxu0 0
      %2234 = vmatpush1.bf16.msra.mxu0 0
      %2235 = vmatprep.subr.bf16.mxu0 0
      %2236 = vmatpush1.bf16.msra.mxu0 0
      %2237 = vmatprep.subr.bf16.mxu0 0
      %2238 = vmatpush1.bf16.msra.mxu0 0
      %2239 = vmatprep.subr.bf16.mxu0 0
      %2240 = vmatpush1.bf16.msra.mxu0 %v2218
      %2241 = vmatprep.subr.bf16.mxu0 0
      %2242 = vmatpush1.bf16.msra.mxu0 %v2217
      %2243 = vmatprep.subr.bf16.mxu0 0
      %2244 = vmatpush2.bf16.msra.mxu0 0
      %2245 = vmatprep.subr.bf16.mxu0 0
      %2246 = vmatpush2.bf16.msra.mxu0 0
      %2247 = vmatprep.subr.bf16.mxu0 0
      %2248 = vmatpush2.bf16.msra.mxu0 0
      %2249 = vmatprep.subr.bf16.mxu0 0
      %2250 = vmatpush2.bf16.msra.mxu0 0
      %2251 = vmatprep.subr.bf16.mxu0 0
      %2252 = vmatpush2.bf16.msra.mxu0 0
      %2253 = vmatprep.subr.bf16.mxu0 0
      %2254 = vmatpush2.bf16.msra.mxu0 0
      %2255 = vmatprep.subr.bf16.mxu0 0
      %2256 = vmatpush2.bf16.msra.mxu0 0
      %2257 = vmatprep.subr.bf16.mxu0 0
      %2258 = vmatpush2.bf16.msra.mxu0 0
      %2259 = vmatprep.mubr.bf16.mxu0 0
      %2260 = vmatmul.mubr.bf16.gmra.mxu0 %v2222
      %v2261 = vpop.f32.mrf.mxu0
      %v2262 = vadd.f32 %v2195, %v2261
      %v2263 = vpop.f32.mrf.mxu0
      %v2264 = vpop.f32.mrf.mxu0
      %v2265 = vadd.f32 %v2198, %v2264
      %v2266 = vpop.f32.mrf.mxu0
      %2267 = vmatprep.mubr.bf16.mxu0 0
      %2268 = vmatmul.mubr.bf16.gmra.mxu0 %v2225
      %v2269 = vpop.f32.mrf.mxu0
      %v2270 = vadd.f32 %v2203, %v2269
      %v2271 = vpop.f32.mrf.mxu0
      %v2272 = vpop.f32.mrf.mxu0
      %v2273 = vadd.f32 %v2206, %v2272
      %v2274 = vpop.f32.mrf.mxu0
      %2275 = vdwg.mxu0
      %v2276 = vlaneseq
      %v2277 = vshrl.u32 %v2276, 7
      %v2278 = vsub.s32 0, %v2277
      %v2279 = vrot.slane %v374, %v2278
      %v2280 = vadd.f32 %v2262, %v2279
      %v2281 = vadd.f32 %v2265, %v2279
      %v2282 = vadd.f32 %v2270, %v2279
      %v2283 = vadd.f32 %v2273, %v2279
      %v2284 = vmax.f32 %v2280, 0.0
      %v2285 = vmax.f32 %v2281, 0.0
      %v2286 = vmax.f32 %v2282, 0.0
      %v2287 = vmax.f32 %v2283, 0.0
      %v2288 = vpack.c.bf16 %v2285, %v2284
      %v2289 = vpack.c.bf16 %v2287, %v2286
      %s2291 = vtos %v375
      %v2292 = vstv %s2291
      %v2295 = vsel %vm2153, %v371, 0
      %v2298 = vsel %vm2153, %v2288, 0
      %v2301 = vsel %vm2153, %v2289, 0
      %2303 = vmatprep.subr.bf16.mxu0 0
      %2304 = vmatpush1.bf16.xpose.msra.mxu0 0
      %2305 = vmatprep.subr.bf16.mxu0 0
      %2306 = vmatpush1.bf16.xpose.msra.mxu0 0
      %2307 = vmatprep.subr.bf16.mxu0 0
      %2308 = vmatpush1.bf16.xpose.msra.mxu0 0
      %2309 = vmatprep.subr.bf16.mxu0 0
      %2310 = vmatpush1.bf16.xpose.msra.mxu0 0
      %2311 = vmatprep.subr.bf16.mxu0 0
      %2312 = vmatpush1.bf16.xpose.msra.mxu0 0
      %2313 = vmatprep.subr.bf16.mxu0 0
      %2314 = vmatpush1.bf16.xpose.msra.mxu0 0
      %2315 = vmatprep.subr.bf16.mxu0 0
      %2316 = vmatpush1.bf16.xpose.msra.mxu0 %v2301
      %2317 = vmatprep.subr.bf16.mxu0 0
      %2318 = vmatpush1.bf16.xpose.msra.mxu0 %v2298
      %2319 = vmatprep.subr.bf16.mxu0 0
      %2320 = vmatpush2.bf16.xpose.msra.mxu0 0
      %2321 = vmatprep.subr.bf16.mxu0 0
      %2322 = vmatpush2.bf16.xpose.msra.mxu0 0
      %2323 = vmatprep.subr.bf16.mxu0 0
      %2324 = vmatpush2.bf16.xpose.msra.mxu0 0
      %2325 = vmatprep.subr.bf16.mxu0 0
      %2326 = vmatpush2.bf16.xpose.msra.mxu0 0
      %2327 = vmatprep.subr.bf16.mxu0 0
      %2328 = vmatpush2.bf16.xpose.msra.mxu0 0
      %2329 = vmatprep.subr.bf16.mxu0 0
      %2330 = vmatpush2.bf16.xpose.msra.mxu0 0
      %2331 = vmatprep.subr.bf16.mxu0 0
      %2332 = vmatpush2.bf16.xpose.msra.mxu0 0
      %2333 = vmatprep.subr.bf16.mxu0 0
      %2334 = vmatpush2.bf16.xpose.msra.mxu0 0
      %2335 = vmatprep.mubr.bf16.mxu0 0
      %2336 = vmatmul.mubr.bf16.gmra.mxu0 %v2295
      %v2337 = vpop.f32.mrf.mxu0
      %v2338 = vadd.f32 %v2292, %v2337
      %v2339 = vpop.f32.mrf.mxu0
      %v2340 = vpop.f32.mrf.mxu0
      %v2341 = vpop.f32.mrf.mxu0
      %2342 = vdwg.mxu0
      %v2343 = vxor.u32 %v2338, 2147483648
      %v2344 = vmul.f32 %v2343, 1.442695
      %v2345 = vpow.pop %v2344
      %v2346 = vadd.f32 %v2345, 1.0
      %v2347 = vrcp.pop %v2346
      %v2348 = vmul.f32 1.0, %v2347
      %2349 = vst.msk [vmem:[%s356] sm:$0xff] %vm2153, %v2348
      %p2350 = scmp.lt.s32.totalorder %s18, 3
      %s2351 = scalar_select %p2350, %s18, 3
      %s2352 = smul.addr %s2351, 8
      %s2353 = scalar_lea.vmem %s7, %s2352
      // Predicated region
      $region56: #{hgmn_forward.1} parent=47 // pred_check
        %p2354 = pneg %p203
      $region57: #{hgmn_forward.1} parent=47 // pred_check_branch
        %2356 = sbr.rel (%p2354) target = $region59
      $region58: #{hgmn_forward.1} parent=47 // pred_region
        _
      $region59: #{hgmn_forward.1} parent=47 // pred_fallthru
        _
    $region48: #{hgmn_forward.1} parent=5 // pred_fallthru
      _
    %p2357 = scmp.le.s32.totalorder 2, %s13
    // Predicated region
    $region60: #{hgmn_forward.1} parent=5 // pred_check
      %p2358 = pneg %p2357
    $region61: #{hgmn_forward.1} parent=5 // pred_check_branch
      %2360 = sbr.rel (%p2358) target = $region63
    $region62: #{hgmn_forward.1} parent=5 // pred_region
      %s2361 = ssub.s32 %s13, 2
      // Predicated region
      $region64: #{hgmn_forward.1} parent=62 // pred_check
        %p2362 = pneg %p209
      $region65: #{hgmn_forward.1} parent=62 // pred_check_branch
        %2364 = sbr.rel (%p2362) target = $region67
      $region66: #{hgmn_forward.1} parent=62 // pred_region
        %p2365 = scmp.lt.s32.totalorder %s19, 3
        %s2366 = scalar_select %p2365, %s19, 3
        %s2367 = smul.addr %s2366, 8
        %s2368 = scalar_lea.vmem %s7, %s2367
      $region67: #{hgmn_forward.1} parent=62 // pred_fallthru
        _
    $region63: #{hgmn_forward.1} parent=5 // pred_fallthru
      _
  $region6: #{hgmn_forward.1} parent=0 // loop_footer
    %s17 = sadd.s32 1, %s13
  $region7: #{hgmn_forward.1} parent=0 // loop_footer_branch
    %12 = sbr.rel target = $region3
  $region8: #{hgmn_forward.1} parent=0 // loop_exit
    _

</llo_original>
